<compile_context>
chip_gen: v7x
topology: tpu7x:2x2x1
jax: 0.10.0
libtpu: 0.0.40
codegen_flags: <defaults>
</compile_context>

<pallas_src>
import functools

import jax
import jax.numpy as jnp
from jax import lax
from jax.experimental import pallas as pl
from jax.experimental.pallas import tpu as pltpu
import numpy as np


GAUSS_BLOCK = 128          # gaussians composited per grid step (lane-width multiple)
MAX_PIXEL_TILE = 2048      # default / v7x-safe max pixels per tile (multiple of 128)
_SKIP_THRESHOLD = 1e-4     # chunk-level early-exit on remaining transmittance


def _round_up(x, m):
    return ((x + m - 1) // m) * m


def _tpu_render_config():
    """(max_pixel_tile, vmem_limit_bytes) tuned per TPU generation."""
    vmem_cap = None
    try:
        vmem_cap = getattr(pltpu.get_tpu_info(), "vmem_capacity_bytes", None)
    except Exception:
        vmem_cap = None
    if vmem_cap is None:
        try:
            kind = jax.devices()[0].device_kind.lower()
            if ("v5 lite" in kind or "v5e" in kind or "v5litepod" in kind
                    or "v6" in kind):
                vmem_cap = 128 * 1024 * 1024
        except Exception:
            pass
    if vmem_cap is not None and vmem_cap >= 96 * 1024 * 1024:
        # v5e / v6e: 128 MiB VMEM -> larger pixel tiles amortize the per-tile
        # re-streaming of the geom/color tables and per-step overhead.
        return 4096, 96 * 1024 * 1024
    # v7x (64 MiB VMEM per TC) or unknown: conservative tile, leave DMA headroom.
    return 2048, 48 * 1024 * 1024


# -----------------------------------------------------------------------------
# Pallas render kernel
# -----------------------------------------------------------------------------
def _render_kernel(coords_ref, geom_ref, color_ref, out_ref, t_ref, flag_ref):
    """One grid step composites one block of G gaussians into one pixel tile.

    coords_ref: VMEM (3, TP)    pixel x / y in NDC + valid-lane mask
    geom_ref  : VMEM (1, G, 6)  [mu_x, mu_y, -.5*ci00, -.5*(ci01+ci10), -.5*ci11, opacity]
    color_ref : VMEM (1, 3, G)  per-gaussian rgb, bf16 (ready for the MXU dot)
    out_ref   : VMEM (1, 3, TP) accumulated image, resident across gaussian chunks
    t_ref     : VMEM (1, TP)    transmittance scratch (prod of (1 - alpha) so far)
    flag_ref  : SMEM (1,) i32   1 while this tile still has open (T > thr) pixels
    """
    k = pl.program_id(2)

    @pl.when(k == 0)
    def _init():
        out_ref[...] = jnp.zeros_like(out_ref)
        t_ref[...] = jnp.ones_like(t_ref)
        flag_ref[0] = jnp.int32(1)

    # Chunk-granular early exit gated on a scalar SMEM flag (no cross-lane
    # reduce / vector->scalar transfer in the per-step predicate path).
    @pl.when(flag_ref[0] != 0)
    def _composite():
        geo = geom_ref[0]                       # (G, 6), gaussians on sublanes
        G = geo.shape[0]

        x = coords_ref[0:1, :]                  # (1, TP)
        y = coords_ref[1:2, :]

        mx = geo[:, 0:1]                        # (G, 1) columns broadcast over pixels
        my = geo[:, 1:2]
        qa = geo[:, 2:3]                        # -0.5 factor pre-folded in wrapper
        qb = geo[:, 3:4]
        qd = geo[:, 4:5]
        op = geo[:, 5:6]

        dx = x - mx                             # (G, TP)
        dy = y - my
        a = jnp.exp(qa * (dx * dx) + qb * (dx * dy) + qd * (dy * dy)) * op
        om = 1.0 - a                            # per-gaussian (1 - alpha)

        # Exact f32 inclusive prefix product of (1 - alpha) along the gaussian
        # (sublane) axis: Hillis-Steele doubling scan built from pltpu.roll
        # (XLU slot) + a (G, 1) arithmetic mask.  No 2G concats, no
        # sublane-unaligned big slices, minimal (G, TP) temporaries.
        row = lax.broadcasted_iota(jnp.int32, (G, 1), 0)
        incl = om
        off = 1
        while off < G:
            keep = (row >= off).astype(jnp.float32)             # (G, 1)
            shifted = pltpu.roll(incl, shift=off, axis=0)
            incl = incl * (shifted * keep + (1.0 - keep))
            off *= 2
        keep = (row >= 1).astype(jnp.float32)
        excl = pltpu.roll(incl, shift=1, axis=0) * keep + (1.0 - keep)

        t_in = t_ref[...]                                       # (1, TP)

        # Front-to-back composite weights, fused into the bf16 cast feeding the
        # MXU color accumulate: (3, G) @ (G, TP) -> (3, TP), f32 accumulate.
        w = ((a * excl) * t_in).astype(jnp.bfloat16)
        out_ref[0] = out_ref[0] + jnp.dot(
            color_ref[0], w, preferred_element_type=jnp.float32)

        # Transmittance after this chunk = T_in * prod_all(1 - alpha).
        t_new = t_in * incl[G - 1:G, :]
        t_ref[...] = t_new

        # Update the scalar early-exit flag; padded lanes (valid = 0) are masked
        # out so they cannot keep the tile "open" forever.
        t_open = jnp.max(t_new * coords_ref[2:3, :], axis=1, keepdims=True)
        flag_ref[0] = (t_open[0, 0] > _SKIP_THRESHOLD).astype(jnp.int32)


def render_gaussians_pallas(coords, geom, colors, *, tile_p, vmem_limit_bytes):
    """coords (3, P), geom (B, Npad, 6) f32, colors (B, 3, Npad) bf16 -> (B, 3, P)."""
    B, n_pad, _ = geom.shape
    P = coords.shape[1]
    G = GAUSS_BLOCK
    grid = (B, P // tile_p, n_pad // G)

    return pl.pallas_call(
        _render_kernel,
        out_shape=jax.ShapeDtypeStruct((B, 3, P), jnp.float32),
        grid_spec=pltpu.PrefetchScalarGridSpec(
            num_scalar_prefetch=0,
            grid=grid,
            in_specs=[
                pl.BlockSpec((3, tile_p), lambda b, j, k: (0, j)),
                pl.BlockSpec((1, G, 6), lambda b, j, k: (b, k, 0)),
                pl.BlockSpec((1, 3, G), lambda b, j, k: (b, 0, k)),
            ],
            out_specs=pl.BlockSpec((1, 3, tile_p), lambda b, j, k: (b, 0, j)),
            scratch_shapes=[
                pltpu.VMEM((1, tile_p), jnp.float32),   # transmittance
                pltpu.SMEM((1,), jnp.int32),            # tile-open flag
            ],
        ),
        compiler_params=pltpu.CompilerParams(
            # batch & pixel-tile axes shard across v7x's 2 TCs; the gaussian-chunk
            # axis is the sequential compositing/accumulator axis.
            dimension_semantics=("parallel", "parallel", "arbitrary"),
            vmem_limit_bytes=vmem_limit_bytes,
        ),
    )(coords, geom, colors)


# -----------------------------------------------------------------------------
# Plain-JAX glue: projection, covariance, depth sort (matches torch semantics)
# -----------------------------------------------------------------------------
def quaternion_to_rotation_matrix(q):
    q = q / jnp.linalg.norm(q, axis=1, keepdims=True)
    w, x, y, z = q[:, 0], q[:, 1], q[:, 2], q[:, 3]
    R = jnp.stack(
        [1 - 2 * y * y - 2 * z * z, 2 * x * y - 2 * w * z, 2 * x * z + 2 * w * y,
         2 * x * y + 2 * w * z, 1 - 2 * x * x - 2 * z * z, 2 * y * z - 2 * w * x,
         2 * x * z - 2 * w * y, 2 * y * z + 2 * w * x, 1 - 2 * x * x - 2 * y * y],
        axis=1)
    return R.reshape(-1, 3, 3)


def build_render_tables(positions, scales, rotations, opacity, features,
                        camera_poses, image_size,
                        gauss_block=GAUSS_BLOCK, max_pixel_tile=MAX_PIXEL_TILE):
    """Builds (coords (3,P), geom (B,Npad,6) f32, colors (B,3,Npad) bf16, tile_p)."""
    B = camera_poses.shape[0]
    N = positions.shape[0]
    H, W = image_size

    # --- project positions -> 2D + depths (matches torch _project_positions) ---
    hom = jnp.concatenate([positions, jnp.ones((N, 1), positions.dtype)], axis=1)
    cam_space = jnp.einsum("nj,bij->bni", hom, camera_poses)      # (B, N, 4)
    depths = cam_space[..., 2]
    positions_2d = cam_space[..., :2] / depths[..., None]

    # --- project scales -> 2D covariance (matches torch _project_scales) ---
    R = quaternion_to_rotation_matrix(rotations)
    RS = R * scales[:, None, :]                                   # R @ diag(s)
    cov_3d = jnp.einsum("nij,nkj->nik", RS, RS)                   # R S S^T R^T
    fx = camera_poses[:, 0, 0][:, None]
    fy = camera_poses[:, 1, 1][:, None]
    xw = positions[:, 0][None, :]
    yw = positions[:, 1][None, :]
    zw = positions[:, 2][None, :]                                 # world z, as in torch
    J = jnp.zeros((B, N, 2, 3), jnp.float32)
    J = J.at[:, :, 0, 0].set(fx / zw)
    J = J.at[:, :, 1, 1].set(fy / zw)
    J = J.at[:, :, 0, 2].set(-fx * xw / (zw * zw))
    J = J.at[:, :, 1, 2].set(-fy * yw / (zw * zw))
    cov_2d = jnp.einsum("bnij,njk,bnlk->bnil", J, cov_3d, J)      # (B, N, 2, 2)

    # --- depth sort, descending (matches torch argsort(..., descending=True)) ---
    order = jnp.argsort(-depths, axis=1)
    bidx = jnp.arange(B)[:, None]
    pos_s = positions_2d[bidx, order]                             # (B, N, 2)
    cov_s = cov_2d[bidx, order]                                   # (B, N, 2, 2)
    col_s = features[order]                                       # (B, N, 3)
    op_s = opacity[order, 0]                                      # (B, N)

    # Analytic 2x2 inverse (no epsilon, matching torch.inverse; cov is symmetric
    # so the two off-diagonal inverse terms are folded together), with the -0.5
    # mahalanobis factor pre-folded so the kernel does one fewer (G,TP) pass.
    A_ = cov_s[..., 0, 0]
    Bc = cov_s[..., 0, 1]
    Cc = cov_s[..., 1, 0]
    D_ = cov_s[..., 1, 1]
    det = A_ * D_ - Bc * Cc
    qa = -0.5 * (D_ / det)
    qb = 0.5 * ((Bc + Cc) / det)
    qd = -0.5 * (A_ / det)

    geom = jnp.stack([pos_s[..., 0], pos_s[..., 1], qa, qb, qd, op_s], axis=-1)
    geom = geom.astype(jnp.float32)
    colors = jnp.transpose(col_s, (0, 2, 1)).astype(jnp.bfloat16)  # (B, 3, N)

    # --- pad gaussians to a multiple of the chunk size (opacity 0 => no-op) ---
    n_pad = _round_up(N, gauss_block)
    if n_pad != N:
        pad_row = jnp.array([0.0, 0.0, -0.5, 0.0, -0.5, 0.0], jnp.float32)
        geom = jnp.concatenate(
            [geom, jnp.tile(pad_row, (B, n_pad - N, 1))], axis=1)
        colors = jnp.concatenate(
            [colors, jnp.zeros((B, 3, n_pad - N), jnp.bfloat16)], axis=2)

    # --- lane-dense pixel coordinate table (3, P): x, y, valid ---
    ys = jnp.linspace(-1.0, 1.0, H)
    xs = jnp.linspace(-1.0, 1.0, W)
    Yg, Xg = jnp.meshgrid(ys, xs, indexing="ij")                  # matches torch grid
    p_img = H * W
    P = _round_up(p_img, 128)
    if P > max_pixel_tile:
        tile_p = max_pixel_tile
        P = _round_up(P, tile_p)
    else:
        tile_p = P
    # v7x megacore: need >= 2 parallel (batch, pixel-tile) blocks or one TC idles.
    if B * (P // tile_p) < 2 and tile_p > 128:
        tile_p = _round_up(P // 2, 128)
        P = _round_up(P, tile_p)

    coords = jnp.zeros((3, P), jnp.float32)
    coords = coords.at[0, :p_img].set(Xg.reshape(-1))
    coords = coords.at[1, :p_img].set(Yg.reshape(-1))
    coords = coords.at[2, :p_img].set(1.0)

    return coords, geom, colors, tile_p


@functools.partial(jax.jit,
                   static_argnames=("image_size", "max_pixel_tile",
                                    "vmem_limit_bytes"))
def _forward_jit(positions, scales, rotations, opacity, features, camera_poses,
                 image_size, max_pixel_tile, vmem_limit_bytes):
    H, W = image_size
    coords, geom, colors, tile_p = build_render_tables(
        positions, scales, rotations, opacity, features, camera_poses, image_size,
        max_pixel_tile=max_pixel_tile)
    out_flat = render_gaussians_pallas(coords, geom, colors, tile_p=tile_p,
                                       vmem_limit_bytes=vmem_limit_bytes)
    return out_flat[:, :, :H * W].reshape(-1, 3, H, W)


def gaussian_splat_forward(positions, scales, rotations, opacity, features,
                           camera_poses, image_size):
    max_pixel_tile, vmem_limit_bytes = _tpu_render_config()
    return _forward_jit(positions, scales, rotations, opacity, features,
                        camera_poses, image_size=image_size,
                        max_pixel_tile=max_pixel_tile,
                        vmem_limit_bytes=vmem_limit_bytes)


# -----------------------------------------------------------------------------
# Pure-JAX reference (sequential front-to-back compositing, for validation)
# -----------------------------------------------------------------------------
def render_reference(coords, geom, colors):
    X = coords[0]
    Y = coords[1]
    P = X.shape[0]

    def per_batch(g_tab, c_tab):            # (Npad, 6) f32, (3, Npad) bf16
        def step(carry, inp):
            out, T = carry
            grow, crow = inp
            mx, my, qa, qb, qd, op = (grow[0], grow[1], grow[2],
                                      grow[3], grow[4], grow[5])
            dx = X - mx
            dy = Y - my
            a = jnp.exp(qa * dx * dx + qb * dx * dy + qd * dy * dy) * op
            w = T * a
            out = out + crow[:, None] * w[None, :]
            T = T * (1.0 - a)
            return (out, T), None

        init = (jnp.zeros((3, P), jnp.float32), jnp.ones((P,), jnp.float32))
        (out, _), _ = lax.scan(step, init, (g_tab, c_tab.T.astype(jnp.float32)))
        return out

    return jax.vmap(per_batch)(geom, colors)   # (B, 3, P)


# -----------------------------------------------------------------------------
# Main
# -----------------------------------------------------------------------------
if __name__ == "__main__":
    B = 2
    N = 200              # num_gaussians (pads to 256 => 2 gaussian chunks)
    H, W = 16, 16

    key = jax.random.PRNGKey(0)
    k1, k2, k3, k4, k5 = jax.random.split(key, 5)

    # Deterministic init mirroring _initialize_parameters()
    positions = jax.random.uniform(k1, (N, 3), jnp.float32, minval=-1.0, maxval=1.0)
    scales = jax.random.uniform(k2, (N, 3), jnp.float32, minval=0.001, maxval=0.1)
    rot_xyz = 0.01 * jax.random.normal(k3, (N, 3), jnp.float32)
    rotations = jnp.concatenate([jnp.ones((N, 1), jnp.float32), rot_xyz], axis=1)
    rotations = rotations / jnp.linalg.norm(rotations, axis=1, keepdims=True)
    opacity = jax.random.uniform(k4, (N, 1), jnp.float32, minval=0.0, maxval=1.0)
    features = jax.random.uniform(k5, (N, 3), jnp.float32, minval=0.0, maxval=1.0)

    # Simple pinhole-ish camera poses (B, 4, 4): camera-space depths stay positive.
    def make_cam(fx, fy, tz):
        c = jnp.eye(4, dtype=jnp.float32)
        c = c.at[0, 0].set(fx).at[1, 1].set(fy).at[2, 3].set(tz)
        return c

    camera_poses = jnp.stack([make_cam(1.2, 1.1, 3.0), make_cam(0.9, 1.3, 4.0)])

    out = gaussian_splat_forward(positions, scales, rotations, opacity, features,
                                 camera_poses, (H, W))
    out = jax.block_until_ready(out)

    # Validate against the pure-JAX sequential reference on the same tables.
    coords, geom, colors, _ = build_render_tables(
        positions, scales, rotations, opacity, features, camera_poses, (H, W))
    ref_flat = jax.block_until_ready(render_reference(coords, geom, colors))
    ref = np.asarray(ref_flat)[:, :, :H * W].reshape(B, 3, H, W)

    assert out.shape == (B, 3, H, W), out.shape
    a = np.nan_to_num(np.asarray(out))
    b = np.nan_to_num(ref)
    # bf16 MXU quantization worst-case is ~4e-3 absolute (colors <= 1, sum(w) <= 1),
    # plus <= 1e-4 from the conservative chunk-granular early exit.
    assert np.allclose(a, b, rtol=0.0, atol=5e-3), float(np.max(np.abs(a - b)))

    print("KERNEL_OK")
</pallas_src>

<mosaic_0001>
module attributes {stable_mosaic.version = 11 : i64} {
  func.func @_render_kernel(%arg0: i32, %arg1: i32, %arg2: i32, %arg3: memref<3x256xf32, #tpu.memory_space<vmem>>, %arg4: memref<1x128x6xf32, #tpu.memory_space<vmem>>, %arg5: memref<1x3x128xbf16, #tpu.memory_space<vmem>>, %arg6: memref<1x3x256xf32, #tpu.memory_space<vmem>>, %arg7: memref<1x256xf32, #tpu.memory_space<vmem>>, %arg8: memref<1xi32, #tpu.memory_space<smem>>) attributes {dimension_semantics = [#tpu.dimension_semantics<parallel>, #tpu.dimension_semantics<parallel>, #tpu.dimension_semantics<arbitrary>], iteration_bounds = array<i64: 2, 1, 2>, scalar_prefetch = 0 : i64, scratch_operands = 2 : i64, tpu.core_type = #tpu.core_type<tc>, window_params = [{transform_indices = @transform_0, window_bounds = array<i64: 3, 256>}, {transform_indices = @transform_1, window_bounds = array<i64: 1, 128, 6>}, {transform_indices = @transform_2, window_bounds = array<i64: 1, 3, 128>}, {transform_indices = @transform_3, window_bounds = array<i64: 1, 3, 256>}]} {
    %c0_i32 = arith.constant 0 : i32
    %0 = arith.cmpi eq, %arg2, %c0_i32 : i32
    %1 = arith.extui %0 : i1 to i32
    %c0_i32_0 = arith.constant 0 : i32
    %2 = arith.cmpi ne, %1, %c0_i32_0 : i32
    scf.if %2 {
      %cst = arith.constant 0.000000e+00 : f32
      %7 = vector.broadcast %cst : f32 to vector<1x3x256xf32>
      %c0_3 = arith.constant 0 : index
      %c0_4 = arith.constant 0 : index
      %c0_5 = arith.constant 0 : index
      %8 = vector.load %arg6[%c0_3, %c0_4, %c0_5] : memref<1x3x256xf32, #tpu.memory_space<vmem>>, vector<1x3x256xf32>
      tpu.vector_store %arg6[%c0_3, %c0_4, %c0_5], %7 {strides = array<i32>} : memref<1x3x256xf32, #tpu.memory_space<vmem>>, vector<1x3x256xf32>,
      %cst_6 = arith.constant 1.000000e+00 : f32
      %9 = vector.broadcast %cst_6 : f32 to vector<1x256xf32>
      %c0_7 = arith.constant 0 : index
      %c0_8 = arith.constant 0 : index
      %10 = vector.load %arg7[%c0_7, %c0_8] : memref<1x256xf32, #tpu.memory_space<vmem>>, vector<1x256xf32>
      tpu.vector_store %arg7[%c0_7, %c0_8], %9 {strides = array<i32>} : memref<1x256xf32, #tpu.memory_space<vmem>>, vector<1x256xf32>,
      %c1_i32 = arith.constant 1 : i32
      %c0_9 = arith.constant 0 : index
      %11 = memref.load %arg8[%c0_9] : memref<1xi32, #tpu.memory_space<smem>>
      memref.store %c1_i32, %arg8[%c0_9] : memref<1xi32, #tpu.memory_space<smem>>
    } else {
    }
    %c0 = arith.constant 0 : index
    %3 = memref.load %arg8[%c0] : memref<1xi32, #tpu.memory_space<smem>>
    %c0_i32_1 = arith.constant 0 : i32
    %4 = arith.cmpi ne, %3, %c0_i32_1 : i32
    %5 = arith.extui %4 : i1 to i32
    %c0_i32_2 = arith.constant 0 : i32
    %6 = arith.cmpi ne, %5, %c0_i32_2 : i32
    scf.if %6 {
      %c0_3 = arith.constant 0 : index
      %c0_4 = arith.constant 0 : index
      %c0_5 = arith.constant 0 : index
      %7 = vector.load %arg4[%c0_3, %c0_4, %c0_5] : memref<1x128x6xf32, #tpu.memory_space<vmem>>, vector<1x128x6xf32>
      %8 = vector.shape_cast %7 : vector<1x128x6xf32> to vector<128x6xf32>
      %c0_6 = arith.constant 0 : index
      %c0_7 = arith.constant 0 : index
      %9 = vector.load %arg3[%c0_6, %c0_7] : memref<3x256xf32, #tpu.memory_space<vmem>>, vector<1x256xf32>
      %c1 = arith.constant 1 : index
      %c0_8 = arith.constant 0 : index
      %10 = vector.load %arg3[%c1, %c0_8] : memref<3x256xf32, #tpu.memory_space<vmem>>, vector<1x256xf32>
      %11 = vector.extract_strided_slice %8 {offsets = [0, 0], sizes = [128, 1], strides = [1, 1]} : vector<128x6xf32> to vector<128x1xf32>
      %12 = vector.extract_strided_slice %8 {offsets = [0, 1], sizes = [128, 1], strides = [1, 1]} : vector<128x6xf32> to vector<128x1xf32>
      %13 = vector.extract_strided_slice %8 {offsets = [0, 2], sizes = [128, 1], strides = [1, 1]} : vector<128x6xf32> to vector<128x1xf32>
      %14 = vector.extract_strided_slice %8 {offsets = [0, 3], sizes = [128, 1], strides = [1, 1]} : vector<128x6xf32> to vector<128x1xf32>
      %15 = vector.extract_strided_slice %8 {offsets = [0, 4], sizes = [128, 1], strides = [1, 1]} : vector<128x6xf32> to vector<128x1xf32>
      %16 = vector.extract_strided_slice %8 {offsets = [0, 5], sizes = [128, 1], strides = [1, 1]} : vector<128x6xf32> to vector<128x1xf32>
      %17 = vector.broadcast %9 : vector<1x256xf32> to vector<128x256xf32>
      %18 = vector.broadcast %11 : vector<128x1xf32> to vector<128x256xf32>
      %19 = arith.subf %17, %18 : vector<128x256xf32>
      %20 = vector.broadcast %10 : vector<1x256xf32> to vector<128x256xf32>
      %21 = vector.broadcast %12 : vector<128x1xf32> to vector<128x256xf32>
      %22 = arith.subf %20, %21 : vector<128x256xf32>
      %23 = arith.mulf %19, %19 : vector<128x256xf32>
      %24 = vector.broadcast %13 : vector<128x1xf32> to vector<128x256xf32>
      %25 = arith.mulf %24, %23 : vector<128x256xf32>
      %26 = arith.mulf %19, %22 : vector<128x256xf32>
      %27 = vector.broadcast %14 : vector<128x1xf32> to vector<128x256xf32>
      %28 = arith.mulf %27, %26 : vector<128x256xf32>
      %29 = arith.addf %25, %28 : vector<128x256xf32>
      %30 = arith.mulf %22, %22 : vector<128x256xf32>
      %31 = vector.broadcast %15 : vector<128x1xf32> to vector<128x256xf32>
      %32 = arith.mulf %31, %30 : vector<128x256xf32>
      %33 = arith.addf %29, %32 : vector<128x256xf32>
      %34 = math.exp %33 : vector<128x256xf32>
      %35 = vector.broadcast %16 : vector<128x1xf32> to vector<128x256xf32>
      %36 = arith.mulf %34, %35 : vector<128x256xf32>
      %cst = arith.constant 1.000000e+00 : f32
      %37 = vector.broadcast %cst : f32 to vector<128x256xf32>
      %38 = arith.subf %37, %36 : vector<128x256xf32>
      %39 = tpu.iota {dimensions = array<i32: 0>} : vector<128x1xi32>
      %c1_i32 = arith.constant 1 : i32
      %40 = vector.broadcast %c1_i32 : i32 to vector<128x1xi32>
      %41 = arith.cmpi sge, %39, %40 : vector<128x1xi32>
      %42 = arith.extui %41 : vector<128x1xi1> to vector<128x1xi32>
      %43 = arith.sitofp %42 : vector<128x1xi32> to vector<128x1xf32>
      %c1_i32_9 = arith.constant 1 : i32
      %44 = tpu.dynamic_rotate %38 by %c1_i32_9 dim 0 : vector<128x256xf32>, i32 -> vector<128x256xf32>
      %45 = vector.broadcast %43 : vector<128x1xf32> to vector<128x256xf32>
      %46 = arith.mulf %44, %45 : vector<128x256xf32>
      %cst_10 = arith.constant 1.000000e+00 : f32
      %47 = vector.broadcast %cst_10 : f32 to vector<128x1xf32>
      %48 = arith.subf %47, %43 : vector<128x1xf32>
      %49 = vector.broadcast %48 : vector<128x1xf32> to vector<128x256xf32>
      %50 = arith.addf %46, %49 : vector<128x256xf32>
      %51 = arith.mulf %38, %50 : vector<128x256xf32>
      %c2_i32 = arith.constant 2 : i32
      %52 = vector.broadcast %c2_i32 : i32 to vector<128x1xi32>
      %53 = arith.cmpi sge, %39, %52 : vector<128x1xi32>
      %54 = arith.extui %53 : vector<128x1xi1> to vector<128x1xi32>
      %55 = arith.sitofp %54 : vector<128x1xi32> to vector<128x1xf32>
      %c2_i32_11 = arith.constant 2 : i32
      %56 = tpu.dynamic_rotate %51 by %c2_i32_11 dim 0 : vector<128x256xf32>, i32 -> vector<128x256xf32>
      %57 = vector.broadcast %55 : vector<128x1xf32> to vector<128x256xf32>
      %58 = arith.mulf %56, %57 : vector<128x256xf32>
      %cst_12 = arith.constant 1.000000e+00 : f32
      %59 = vector.broadcast %cst_12 : f32 to vector<128x1xf32>
      %60 = arith.subf %59, %55 : vector<128x1xf32>
      %61 = vector.broadcast %60 : vector<128x1xf32> to vector<128x256xf32>
      %62 = arith.addf %58, %61 : vector<128x256xf32>
      %63 = arith.mulf %51, %62 : vector<128x256xf32>
      %c4_i32 = arith.constant 4 : i32
      %64 = vector.broadcast %c4_i32 : i32 to vector<128x1xi32>
      %65 = arith.cmpi sge, %39, %64 : vector<128x1xi32>
      %66 = arith.extui %65 : vector<128x1xi1> to vector<128x1xi32>
      %67 = arith.sitofp %66 : vector<128x1xi32> to vector<128x1xf32>
      %c4_i32_13 = arith.constant 4 : i32
      %68 = tpu.dynamic_rotate %63 by %c4_i32_13 dim 0 : vector<128x256xf32>, i32 -> vector<128x256xf32>
      %69 = vector.broadcast %67 : vector<128x1xf32> to vector<128x256xf32>
      %70 = arith.mulf %68, %69 : vector<128x256xf32>
      %cst_14 = arith.constant 1.000000e+00 : f32
      %71 = vector.broadcast %cst_14 : f32 to vector<128x1xf32>
      %72 = arith.subf %71, %67 : vector<128x1xf32>
      %73 = vector.broadcast %72 : vector<128x1xf32> to vector<128x256xf32>
      %74 = arith.addf %70, %73 : vector<128x256xf32>
      %75 = arith.mulf %63, %74 : vector<128x256xf32>
      %c8_i32 = arith.constant 8 : i32
      %76 = vector.broadcast %c8_i32 : i32 to vector<128x1xi32>
      %77 = arith.cmpi sge, %39, %76 : vector<128x1xi32>
      %78 = arith.extui %77 : vector<128x1xi1> to vector<128x1xi32>
      %79 = arith.sitofp %78 : vector<128x1xi32> to vector<128x1xf32>
      %c8_i32_15 = arith.constant 8 : i32
      %80 = tpu.dynamic_rotate %75 by %c8_i32_15 dim 0 : vector<128x256xf32>, i32 -> vector<128x256xf32>
      %81 = vector.broadcast %79 : vector<128x1xf32> to vector<128x256xf32>
      %82 = arith.mulf %80, %81 : vector<128x256xf32>
      %cst_16 = arith.constant 1.000000e+00 : f32
      %83 = vector.broadcast %cst_16 : f32 to vector<128x1xf32>
      %84 = arith.subf %83, %79 : vector<128x1xf32>
      %85 = vector.broadcast %84 : vector<128x1xf32> to vector<128x256xf32>
      %86 = arith.addf %82, %85 : vector<128x256xf32>
      %87 = arith.mulf %75, %86 : vector<128x256xf32>
      %c16_i32 = arith.constant 16 : i32
      %88 = vector.broadcast %c16_i32 : i32 to vector<128x1xi32>
      %89 = arith.cmpi sge, %39, %88 : vector<128x1xi32>
      %90 = arith.extui %89 : vector<128x1xi1> to vector<128x1xi32>
      %91 = arith.sitofp %90 : vector<128x1xi32> to vector<128x1xf32>
      %c16_i32_17 = arith.constant 16 : i32
      %92 = tpu.dynamic_rotate %87 by %c16_i32_17 dim 0 : vector<128x256xf32>, i32 -> vector<128x256xf32>
      %93 = vector.broadcast %91 : vector<128x1xf32> to vector<128x256xf32>
      %94 = arith.mulf %92, %93 : vector<128x256xf32>
      %cst_18 = arith.constant 1.000000e+00 : f32
      %95 = vector.broadcast %cst_18 : f32 to vector<128x1xf32>
      %96 = arith.subf %95, %91 : vector<128x1xf32>
      %97 = vector.broadcast %96 : vector<128x1xf32> to vector<128x256xf32>
      %98 = arith.addf %94, %97 : vector<128x256xf32>
      %99 = arith.mulf %87, %98 : vector<128x256xf32>
      %c32_i32 = arith.constant 32 : i32
      %100 = vector.broadcast %c32_i32 : i32 to vector<128x1xi32>
      %101 = arith.cmpi sge, %39, %100 : vector<128x1xi32>
      %102 = arith.extui %101 : vector<128x1xi1> to vector<128x1xi32>
      %103 = arith.sitofp %102 : vector<128x1xi32> to vector<128x1xf32>
      %c32_i32_19 = arith.constant 32 : i32
      %104 = tpu.dynamic_rotate %99 by %c32_i32_19 dim 0 : vector<128x256xf32>, i32 -> vector<128x256xf32>
      %105 = vector.broadcast %103 : vector<128x1xf32> to vector<128x256xf32>
      %106 = arith.mulf %104, %105 : vector<128x256xf32>
      %cst_20 = arith.constant 1.000000e+00 : f32
      %107 = vector.broadcast %cst_20 : f32 to vector<128x1xf32>
      %108 = arith.subf %107, %103 : vector<128x1xf32>
      %109 = vector.broadcast %108 : vector<128x1xf32> to vector<128x256xf32>
      %110 = arith.addf %106, %109 : vector<128x256xf32>
      %111 = arith.mulf %99, %110 : vector<128x256xf32>
      %c64_i32 = arith.constant 64 : i32
      %112 = vector.broadcast %c64_i32 : i32 to vector<128x1xi32>
      %113 = arith.cmpi sge, %39, %112 : vector<128x1xi32>
      %114 = arith.extui %113 : vector<128x1xi1> to vector<128x1xi32>
      %115 = arith.sitofp %114 : vector<128x1xi32> to vector<128x1xf32>
      %c64_i32_21 = arith.constant 64 : i32
      %116 = tpu.dynamic_rotate %111 by %c64_i32_21 dim 0 : vector<128x256xf32>, i32 -> vector<128x256xf32>
      %117 = vector.broadcast %115 : vector<128x1xf32> to vector<128x256xf32>
      %118 = arith.mulf %116, %117 : vector<128x256xf32>
      %cst_22 = arith.constant 1.000000e+00 : f32
      %119 = vector.broadcast %cst_22 : f32 to vector<128x1xf32>
      %120 = arith.subf %119, %115 : vector<128x1xf32>
      %121 = vector.broadcast %120 : vector<128x1xf32> to vector<128x256xf32>
      %122 = arith.addf %118, %121 : vector<128x256xf32>
      %123 = arith.mulf %111, %122 : vector<128x256xf32>
      %c1_i32_23 = arith.constant 1 : i32
      %124 = vector.broadcast %c1_i32_23 : i32 to vector<128x1xi32>
      %125 = arith.cmpi sge, %39, %124 : vector<128x1xi32>
      %126 = arith.extui %125 : vector<128x1xi1> to vector<128x1xi32>
      %127 = arith.sitofp %126 : vector<128x1xi32> to vector<128x1xf32>
      %c1_i32_24 = arith.constant 1 : i32
      %128 = tpu.dynamic_rotate %123 by %c1_i32_24 dim 0 : vector<128x256xf32>, i32 -> vector<128x256xf32>
      %129 = vector.broadcast %127 : vector<128x1xf32> to vector<128x256xf32>
      %130 = arith.mulf %128, %129 : vector<128x256xf32>
      %cst_25 = arith.constant 1.000000e+00 : f32
      %131 = vector.broadcast %cst_25 : f32 to vector<128x1xf32>
      %132 = arith.subf %131, %127 : vector<128x1xf32>
      %133 = vector.broadcast %132 : vector<128x1xf32> to vector<128x256xf32>
      %134 = arith.addf %130, %133 : vector<128x256xf32>
      %c0_26 = arith.constant 0 : index
      %c0_27 = arith.constant 0 : index
      %135 = vector.load %arg7[%c0_26, %c0_27] : memref<1x256xf32, #tpu.memory_space<vmem>>, vector<1x256xf32>
      %136 = arith.mulf %36, %134 : vector<128x256xf32>
      %137 = vector.broadcast %135 : vector<1x256xf32> to vector<128x256xf32>
      %138 = arith.mulf %136, %137 : vector<128x256xf32>
      %139 = arith.truncf %138 : vector<128x256xf32> to vector<128x256xbf16>
      %c0_28 = arith.constant 0 : index
      %c0_29 = arith.constant 0 : index
      %c0_30 = arith.constant 0 : index
      %140 = vector.load %arg6[%c0_28, %c0_29, %c0_30] : memref<1x3x256xf32, #tpu.memory_space<vmem>>, vector<1x3x256xf32>
      %141 = vector.shape_cast %140 : vector<1x3x256xf32> to vector<3x256xf32>
      %c0_31 = arith.constant 0 : index
      %c0_32 = arith.constant 0 : index
      %c0_33 = arith.constant 0 : index
      %142 = vector.load %arg5[%c0_31, %c0_32, %c0_33] : memref<1x3x128xbf16, #tpu.memory_space<vmem>>, vector<1x3x128xbf16>
      %143 = vector.shape_cast %142 : vector<1x3x128xbf16> to vector<3x128xbf16>
      %cst_34 = arith.constant dense<0.000000e+00> : vector<3x256xf32>
      %144 = tpu.matmul %143, %139, %cst_34 {dimension_numbers = #tpu.dot_dimension_numbers<[1], [0], [0], [1], [0, 0, 1, 1], [], []>} : vector<3x128xbf16>, vector<128x256xbf16>, vector<3x256xf32> -> vector<3x256xf32>
      %145 = arith.addf %141, %144 : vector<3x256xf32>
      %c0_35 = arith.constant 0 : index
      %c0_36 = arith.constant 0 : index
      %c0_37 = arith.constant 0 : index
      %146 = vector.load %arg6[%c0_35, %c0_36, %c0_37] : memref<1x3x256xf32, #tpu.memory_space<vmem>>, vector<1x3x256xf32>
      %147 = vector.shape_cast %146 : vector<1x3x256xf32> to vector<3x256xf32>
      %148 = vector.shape_cast %145 : vector<3x256xf32> to vector<1x3x256xf32>
      tpu.vector_store %arg6[%c0_35, %c0_36, %c0_37], %148 {strides = array<i32>} : memref<1x3x256xf32, #tpu.memory_space<vmem>>, vector<1x3x256xf32>,
      %149 = vector.extract_strided_slice %123 {offsets = [127, 0], sizes = [1, 256], strides = [1, 1]} : vector<128x256xf32> to vector<1x256xf32>
      %150 = arith.mulf %135, %149 : vector<1x256xf32>
      %c0_38 = arith.constant 0 : index
      %c0_39 = arith.constant 0 : index
      %151 = vector.load %arg7[%c0_38, %c0_39] : memref<1x256xf32, #tpu.memory_space<vmem>>, vector<1x256xf32>
      tpu.vector_store %arg7[%c0_38, %c0_39], %150 {strides = array<i32>} : memref<1x256xf32, #tpu.memory_space<vmem>>, vector<1x256xf32>,
      %c2 = arith.constant 2 : index
      %c0_40 = arith.constant 0 : index
      %152 = vector.load %arg3[%c2, %c0_40] : memref<3x256xf32, #tpu.memory_space<vmem>>, vector<1x256xf32>
      %153 = arith.mulf %150, %152 : vector<1x256xf32>
      %cst_41 = arith.constant dense<0xFF800000> : vector<1xf32>
      %154 = vector.multi_reduction <maximumf>, %153, %cst_41 [1] : vector<1x256xf32> to vector<1xf32>
      %155 = vector.shape_cast %154 : vector<1xf32> to vector<1x1xf32>
      %156 = vector.extract %155[0, 0] : f32 from vector<1x1xf32>
      %cst_42 = arith.constant 9.99999974E-5 : f32
      %157 = arith.cmpf ogt, %156, %cst_42 : f32
      %158 = arith.extui %157 : i1 to i32
      %c0_43 = arith.constant 0 : index
      %159 = memref.load %arg8[%c0_43] : memref<1xi32, #tpu.memory_space<smem>>
      memref.store %158, %arg8[%c0_43] : memref<1xi32, #tpu.memory_space<smem>>
    } else {
    }
    return
  }
  func.func @transform_0(%arg0: i32, %arg1: i32, %arg2: i32) -> (i32, i32) {
    %c0_i32 = arith.constant 0 : i32
    %c0_i32_0 = arith.constant 0 : i32
    return %c0_i32, %arg1 : i32, i32
  }
  func.func @transform_1(%arg0: i32, %arg1: i32, %arg2: i32) -> (i32, i32, i32) {
    %c0_i32 = arith.constant 0 : i32
    %c0_i32_0 = arith.constant 0 : i32
    return %arg0, %arg2, %c0_i32 : i32, i32, i32
  }
  func.func @transform_2(%arg0: i32, %arg1: i32, %arg2: i32) -> (i32, i32, i32) {
    %c0_i32 = arith.constant 0 : i32
    %c0_i32_0 = arith.constant 0 : i32
    return %arg0, %c0_i32, %arg2 : i32, i32, i32
  }
  func.func @transform_3(%arg0: i32, %arg1: i32, %arg2: i32) -> (i32, i32, i32) {
    %c0_i32 = arith.constant 0 : i32
    %c0_i32_0 = arith.constant 0 : i32
    return %arg0, %c0_i32, %arg1 : i32, i32, i32
  }
}

</mosaic_0001>

<llo_original>
// kernel: mul.56
$region0: #{mul.56}
  #allocation0 [shape = 's32[1]{0}', space=sflag, size = 0x4, scoped, tag = 'scoped memory for mul.56']
  %s0 = inlined_call_operand.vmem [shape: f32[200], index: 0, kind: input, shape index: {}, may-alias: {0,1}]
  %s1 = inlined_call_operand.vmem [shape: f32[200], index: 1, kind: input, shape index: {}, may-alias: {0,1}]
  %s2 = inlined_call_operand.vmem [shape: f32[200], index: 2, kind: output, shape index: {}]
  %v3 = vld [vmem:[%s0] sm:$0x3]
  %v4 = vld [vmem:[%s1] sm:$0x3]
  %5 = xla_tuple %v3, %v4
  %6 = xla_tuple %5
  %v7 = vmul.f32 %v3, %v4
  %8 = xla_tuple %v7
  %9 = vst [vmem:[%s2] sm:$0x3] %v7

// kernel: neg.10
$region0: #{neg.10}
  #allocation0 [shape = 's32[1]{0}', space=sflag, size = 0x4, scoped, tag = 'scoped memory for neg.10']
  %s0 = inlined_call_operand.vmem [shape: f32[2], index: 0, kind: input, shape index: {}]
  %s1 = inlined_call_operand.vmem [shape: f32[2], index: 1, kind: output, shape index: {}]
  %v2 = vld [vmem:[%s0] sm:$0x1]
  %3 = xla_tuple %v2
  %4 = xla_tuple %3
  %v5 = vxor.u32 %v2, 2147483648
  %6 = xla_tuple %v5
  %7 = vst [vmem:[%s1] sm:$0x1] %v5

// kernel: _forward_jit.1
$region0: #{_forward_jit.1}
  #allocation0 [shape = 'u32[]', space=smem, size = 0x4, offset = 0x4, fixed_abs, tag = 'smem constant byte address 0x4 - core index']
  #allocation1 [shape = 'u32[144,128]{1,0:T(1,128)}', space=vmem, size = 0x12000, scoped, tag = 'internal scratch']
  #allocation2 [shape = 'f32[1,256]{1,0:T(1,128)}', space=vmem, size = 0x400, scoped, tag = 'scratch operand']
  #allocation3 [shape = 's32[1]{0:T(128)}', space=smem, size = 0x200, scoped, tag = 'scratch operand']
  %s0 = inlined_call_operand.vmem [shape: f32[3,256], index: 0, kind: input, shape index: {}]
  %s1 = inlined_call_operand.vmem [shape: f32[2,256,6], index: 1, kind: input, shape index: {}]
  %s2 = inlined_call_operand.vmem [shape: bf16[2,3,256], index: 2, kind: input, shape index: {}]
  %s3 = inlined_call_operand.vmem [shape: f32[2,3,256], index: 3, kind: output, shape index: {}]
  %s4 = sld [smem:[#allocation0]]
  $region53: #{_forward_jit.1} parent=0
    _
  %s6 = ssub.s32 1, %s4
  %s7 = scalar_select 0, %s6, %s4
  loop: start=0, step=1, limit=6
  $region2: #{_forward_jit.1} parent=0 // loop_pre_header
    _
  $region3: #{_forward_jit.1} parent=0 // loop_header
    %s9 = sphi 0, %s13
    %p10 = scmp.ge.s32.totalorder %s9, 6
    %s16 = sphi 0, %s35
    %s17 = sphi 0, %s31
    %s18 = sphi 0, %s27
    %s19 = sphi 0, %s16
    %s20 = sphi 0, %s17
    %s21 = sphi 0, %s18
    %s22 = sphi 0, %s19
    %s23 = sphi 0, %s20
    %s24 = sphi 0, %s21
    %s38 = sphi 0, %s40
    %s41 = sphi 0, %s38
    %s42 = sphi 0, %s41
    %s58 = sphi 0, %s42
    %s66 = sphi 0, %s68
    %s69 = sphi 0, %s66
    %s70 = sphi 0, %s69
    %s86 = sphi 0, %s70
    %s94 = sphi 0, %s96
    %s97 = sphi 0, %s94
    %s98 = sphi 0, %s97
    %s114 = sphi 0, %s98
    %s122 = sphi 0, %s124
    %s125 = sphi 0, %s122
    %s126 = sphi 0, %s125
    %s142 = sphi 0, %s126
  $region4: #{_forward_jit.1} parent=0 // loop_header_branch
    %12 = sbr.rel (%p10) target = $region8
  $region5: #{_forward_jit.1} parent=0 // loop_body
    %s14 = ssub.s32 %s9, 1
    %s15 = ssub.s32 %s9, 2
    %s25 = sadd.s32 1, %s18
    %p26 = scmp.ge.s32.totalorder %s25, 2
    %s27 = scalar_select %p26, 0, %s25
    %s28 = sadd.s32 1, %s17
    %s29 = scalar_select %p26, %s28, %s17
    %p30 = scmp.ge.s32.totalorder %s29, 1
    %s31 = scalar_select %p30, 0, %s29
    %s32 = sadd.s32 1, %s16
    %s33 = scalar_select %p30, %s32, %s16
    %p34 = scmp.ge.s32.totalorder %s33, 2
    %s35 = scalar_select %p34, 0, %s33
    %s36 = ssub.s32 %s17, %s31
    %p37 = scmp.eq.s32.totalorder %s36, 0
    %s39 = sadd.s32 %s38, 1
    %s40 = scalar_select %p37, %s38, %s39
    %p43 = pneg %p37
    %p44 = scmp.eq.s32.totalorder %s9, 3
    %p45 = por %p43, %p44
    %p46 = scmp.ne.s32.totalorder %s38, %s41
    %p47 = scmp.eq.s32.totalorder %s9, 0
    %p48 = por %p46, %p47
    %p49 = scmp.ne.s32.totalorder %s38, %s41
    %p50 = scmp.eq.s32.totalorder %s14, 3
    %p51 = por %p49, %p50
    %p52 = scmp.ne.s32.totalorder %s41, %s42
    %p53 = scmp.eq.s32.totalorder %s14, 0
    %p54 = por %p52, %p53
    %p55 = scmp.ne.s32.totalorder %s41, %s42
    %p56 = scmp.eq.s32.totalorder %s15, 3
    %p57 = por %p55, %p56
    %p59 = scmp.ne.s32.totalorder %s42, %s58
    %p60 = scmp.eq.s32.totalorder %s15, 0
    %p61 = por %p59, %p60
    %s62 = ssub.s32 %s16, %s35
    %s63 = ssub.s32 %s18, %s27
    %s64 = sor.u32 %s62, %s63
    %p65 = scmp.eq.s32.totalorder %s64, 0
    %s67 = sadd.s32 %s66, 1
    %s68 = scalar_select %p65, %s66, %s67
    %p71 = pneg %p65
    %p72 = scmp.eq.s32.totalorder %s9, 3
    %p73 = por %p71, %p72
    %p74 = scmp.ne.s32.totalorder %s66, %s69
    %p75 = scmp.eq.s32.totalorder %s9, 0
    %p76 = por %p74, %p75
    %p77 = scmp.ne.s32.totalorder %s66, %s69
    %p78 = scmp.eq.s32.totalorder %s14, 3
    %p79 = por %p77, %p78
    %p80 = scmp.ne.s32.totalorder %s69, %s70
    %p81 = scmp.eq.s32.totalorder %s14, 0
    %p82 = por %p80, %p81
    %p83 = scmp.ne.s32.totalorder %s69, %s70
    %p84 = scmp.eq.s32.totalorder %s15, 3
    %p85 = por %p83, %p84
    %p87 = scmp.ne.s32.totalorder %s70, %s86
    %p88 = scmp.eq.s32.totalorder %s15, 0
    %p89 = por %p87, %p88
    %s90 = ssub.s32 %s16, %s35
    %s91 = ssub.s32 %s18, %s27
    %s92 = sor.u32 %s90, %s91
    %p93 = scmp.eq.s32.totalorder %s92, 0
    %s95 = sadd.s32 %s94, 1
    %s96 = scalar_select %p93, %s94, %s95
    %p99 = pneg %p93
    %p100 = scmp.eq.s32.totalorder %s9, 3
    %p101 = por %p99, %p100
    %p102 = scmp.ne.s32.totalorder %s94, %s97
    %p103 = scmp.eq.s32.totalorder %s9, 0
    %p104 = por %p102, %p103
    %p105 = scmp.ne.s32.totalorder %s94, %s97
    %p106 = scmp.eq.s32.totalorder %s14, 3
    %p107 = por %p105, %p106
    %p108 = scmp.ne.s32.totalorder %s97, %s98
    %p109 = scmp.eq.s32.totalorder %s14, 0
    %p110 = por %p108, %p109
    %p111 = scmp.ne.s32.totalorder %s97, %s98
    %p112 = scmp.eq.s32.totalorder %s15, 3
    %p113 = por %p111, %p112
    %p115 = scmp.ne.s32.totalorder %s98, %s114
    %p116 = scmp.eq.s32.totalorder %s15, 0
    %p117 = por %p115, %p116
    %s118 = ssub.s32 %s16, %s35
    %s119 = ssub.s32 %s17, %s31
    %s120 = sor.u32 %s118, %s119
    %p121 = scmp.eq.s32.totalorder %s120, 0
    %s123 = sadd.s32 %s122, 1
    %s124 = scalar_select %p121, %s122, %s123
    %p127 = pneg %p121
    %p128 = scmp.eq.s32.totalorder %s9, 3
    %p129 = por %p127, %p128
    %p130 = scmp.ne.s32.totalorder %s122, %s125
    %p131 = scmp.eq.s32.totalorder %s9, 0
    %p132 = por %p130, %p131
    %p133 = scmp.ne.s32.totalorder %s122, %s125
    %p134 = scmp.eq.s32.totalorder %s14, 3
    %p135 = por %p133, %p134
    %p136 = scmp.ne.s32.totalorder %s125, %s126
    %p137 = scmp.eq.s32.totalorder %s14, 0
    %p138 = por %p136, %p137
    %p139 = scmp.ne.s32.totalorder %s125, %s126
    %p140 = scmp.eq.s32.totalorder %s15, 3
    %p141 = por %p139, %p140
    %p143 = scmp.ne.s32.totalorder %s126, %s142
    %p144 = scmp.eq.s32.totalorder %s15, 0
    %p145 = por %p143, %p144
    %p146 = scmp.le.s32.totalorder 1, %s9
    %p147 = scmp.lt.s32.totalorder %s9, 5
    %p148 = pnand %p146, %p147
    %p149 = pneg %p148
    // Predicated region
    $region9: #{_forward_jit.1} parent=5 // pred_check
      _
    $region10: #{_forward_jit.1} parent=5 // pred_check_branch
      %151 = sbr.rel (%p148) target = $region12
    $region11: #{_forward_jit.1} parent=5 // pred_region
      %s152 = ssub.s32 %s9, 1
      // Predicated region
      $region13: #{_forward_jit.1} parent=11 // pred_check
        %p153 = pneg %p54
      $region14: #{_forward_jit.1} parent=11 // pred_check_branch
        %155 = sbr.rel (%p153) target = $region16
      $region15: #{_forward_jit.1} parent=11 // pred_region
        %s156 = smul.u32 2, %s20
        %p157 = scmp.lt.s32.totalorder %s156, 1
        %s158 = scalar_select %p157, %s156, 1
        %s159 = smul.addr %s158, 4
        %s160 = scalar_lea.vmem %s0, %s159
        %s161 = smul.u32 2, %s20
      $region16: #{_forward_jit.1} parent=11 // pred_fallthru
        _
    $region12: #{_forward_jit.1} parent=5 // pred_fallthru
      _
    %p162 = scmp.lt.s32.totalorder %s9, 4
    // Predicated region
    $region17: #{_forward_jit.1} parent=5 // pred_check
      %p163 = pneg %p162
    $region18: #{_forward_jit.1} parent=5 // pred_check_branch
      %165 = sbr.rel (%p163) target = $region20
    $region19: #{_forward_jit.1} parent=5 // pred_region
      // Predicated region
      $region21: #{_forward_jit.1} parent=19 // pred_check
        %p166 = pneg %p76
      $region22: #{_forward_jit.1} parent=19 // pred_check_branch
        %168 = sbr.rel (%p166) target = $region24
      $region23: #{_forward_jit.1} parent=19 // pred_region
        %s169 = smul.u32 16, %s18
        %p170 = scmp.lt.s32.totalorder %s16, 1
        %s171 = scalar_select %p170, %s16, 1
        %p172 = scmp.lt.s32.totalorder %s169, 31
        %s173 = scalar_select %p172, %s169, 31
        %s174 = smul.addr %s171, 32
        %s175 = sadd.s32 %s173, %s174
        %s176 = smul.addr %s175, 8
        %s177 = scalar_lea.vmem %s1, %s176
        %s178 = smul.u32 16, %s18
      $region24: #{_forward_jit.1} parent=19 // pred_fallthru
        _
      // Predicated region
      $region25: #{_forward_jit.1} parent=19 // pred_check
        %p179 = pneg %p104
      $region26: #{_forward_jit.1} parent=19 // pred_check_branch
        %181 = sbr.rel (%p179) target = $region28
      $region27: #{_forward_jit.1} parent=19 // pred_region
        %p182 = scmp.lt.s32.totalorder %s16, 1
        %s183 = scalar_select %p182, %s16, 1
        %p184 = scmp.lt.s32.totalorder %s18, 1
        %s185 = scalar_select %p184, %s18, 1
        %s186 = smul.addr %s183, 2
        %s187 = sadd.s32 %s185, %s186
        %s188 = smul.addr %s187, 2
        %s189 = scalar_lea.vmem %s2, %s188
      $region28: #{_forward_jit.1} parent=19 // pred_fallthru
        _
    $region20: #{_forward_jit.1} parent=5 // pred_fallthru
      _
    %p190 = scmp.le.s32.totalorder 1, %s9
    %p191 = scmp.lt.s32.totalorder %s9, 5
    %p192 = pnand %p190, %p191
    %p193 = pneg %p192
    // Predicated region
    $region29: #{_forward_jit.1} parent=5 // pred_check
      _
    $region30: #{_forward_jit.1} parent=5 // pred_check_branch
      %195 = sbr.rel (%p192) target = $region32
    $region31: #{_forward_jit.1} parent=5 // pred_region
      %s196 = ssub.s32 %s9, 1
      %s197 = smul.u32 2, %s20
      %p198 = scmp.lt.s32.totalorder %s197, 1
      %s199 = scalar_select %p198, %s197, 1
      %s200 = smul.addr %s199, 4
      %s201 = scalar_lea.vmem %s0, %s200
      %p202 = pneg %p54
      %p203 = pneg %p51
      %s204 = smul.u32 16, %s21
      %p205 = scmp.lt.s32.totalorder %s19, 1
      %s206 = scalar_select %p205, %s19, 1
      %p207 = scmp.lt.s32.totalorder %s204, 31
      %s208 = scalar_select %p207, %s204, 31
      %s209 = smul.addr %s206, 32
      %s210 = sadd.s32 %s208, %s209
      %s211 = smul.addr %s210, 8
      %s212 = scalar_lea.vmem %s1, %s211
      %p213 = pneg %p82
      %p214 = pneg %p79
      %p215 = scmp.lt.s32.totalorder %s19, 1
      %s216 = scalar_select %p215, %s19, 1
      %p217 = scmp.lt.s32.totalorder %s21, 1
      %s218 = scalar_select %p217, %s21, 1
      %s219 = smul.addr %s216, 2
      %s220 = sadd.s32 %s218, %s219
      %s221 = smul.addr %s220, 2
      %s222 = scalar_lea.vmem %s2, %s221
      %p223 = pneg %p110
      %p224 = pneg %p107
      %p225 = pneg %p138
      %p226 = pneg %p135
      %s227 = smul.u32 2, %s20
      %p228 = scmp.lt.s32.totalorder %s19, 1
      %s229 = scalar_select %p228, %s19, 1
      %p230 = scmp.lt.s32.totalorder %s227, 1
      %s231 = scalar_select %p230, %s227, 1
      %s232 = smul.addr %s229, 2
      %s233 = sadd.s32 %s231, %s232
      %s234 = smul.addr %s233, 4
      %s235 = scalar_lea.vmem %s3, %s234
      %s236 = smul.u32 2, %s20
      %p237 = scmp.lt.s32.totalorder %s236, 1
      %s238 = scalar_select %p237, %s236, 1
      %s239 = smul.addr %s238, 4
      %s240 = scalar_lea.vmem %s0, %s239
      %s241 = smul.u32 2, %s20
      %s242 = smul.u32 16, %s21
      %p243 = scmp.lt.s32.totalorder %s19, 1
      %s244 = scalar_select %p243, %s19, 1
      %p245 = scmp.lt.s32.totalorder %s242, 31
      %s246 = scalar_select %p245, %s242, 31
      %s247 = smul.addr %s244, 32
      %s248 = sadd.s32 %s246, %s247
      %s249 = smul.addr %s248, 8
      %s250 = scalar_lea.vmem %s1, %s249
      %s251 = smul.u32 16, %s21
      %p252 = scmp.lt.s32.totalorder %s19, 1
      %s253 = scalar_select %p252, %s19, 1
      %p254 = scmp.lt.s32.totalorder %s21, 1
      %s255 = scalar_select %p254, %s21, 1
      %s256 = smul.addr %s253, 2
      %s257 = sadd.s32 %s255, %s256
      %s258 = smul.addr %s257, 2
      %s259 = scalar_lea.vmem %s2, %s258
      %s260 = smul.u32 2, %s20
      %p261 = scmp.lt.s32.totalorder %s19, 1
      %s262 = scalar_select %p261, %s19, 1
      %p263 = scmp.lt.s32.totalorder %s260, 1
      %s264 = scalar_select %p263, %s260, 1
      %s265 = smul.addr %s262, 2
      %s266 = sadd.s32 %s264, %s265
      %s267 = smul.addr %s266, 4
      %s268 = scalar_lea.vmem %s3, %s267
      %s269 = smul.u32 2, %s20
      %p271 = scmp.eq.s32.totalorder %s21, 0
      // Predicated region
      $region33: #{_forward_jit.1} parent=31 // pred_check
        %p272 = pneg %p271
      $region34: #{_forward_jit.1} parent=31 // pred_check_branch
        %274 = sbr.rel (%p272) target = $region36
      $region35: #{_forward_jit.1} parent=31 // pred_region
        %275 = vst [vmem:[%s268] sm:$0x77] 0.0
        %v276 = vlaneseq
        %vm277 = vcmp.ge.s32.totalorder %v276, 0
        %vm278 = vcmp.lt.s32.totalorder %v276, 256
        %vm279 = vmand %vm277, %vm278
        %280 = vst.msk [vmem:[#allocation2] sm:$0x3] %vm279, 1.0
        %s281 = scalar_lea.smem [#allocation3], 0
        %282 = sst [smem:[%s281]] 1
      $region36: #{_forward_jit.1} parent=31 // pred_fallthru
        _
      %s283 = sld [smem:[#allocation3]]
      %p284 = scmp.ne.s32.totalorder %s283, 0
      // Predicated region
      $region37: #{_forward_jit.1} parent=31 // pred_check
        %p285 = pneg %p284
      $region38: #{_forward_jit.1} parent=31 // pred_check_branch
        %287 = sbr.rel (%p285) target = $region40
      $region39: #{_forward_jit.1} parent=31 // pred_region
        %v288 = vld [vmem:[%s250] sm:$0xff]
        %v289 = vld [vmem:[%s250 + $0x8] sm:$0xff]
        %v290 = vld [vmem:[%s250 + $0x10] sm:$0xff]
        %v291 = vld [vmem:[%s250 + $0x18] sm:$0xff]
        %v292 = vld [vmem:[%s250 + $0x20] sm:$0xff]
        %v293 = vld [vmem:[%s250 + $0x28] sm:$0xff]
        %v294 = vld [vmem:[%s250 + $0x30] sm:$0xff]
        %v295 = vld [vmem:[%s250 + $0x38] sm:$0xff]
        %v296 = vld [vmem:[%s250 + $0x40] sm:$0xff]
        %v297 = vld [vmem:[%s250 + $0x48] sm:$0xff]
        %v298 = vld [vmem:[%s250 + $0x50] sm:$0xff]
        %v299 = vld [vmem:[%s250 + $0x58] sm:$0xff]
        %v300 = vld [vmem:[%s250 + $0x60] sm:$0xff]
        %v301 = vld [vmem:[%s250 + $0x68] sm:$0xff]
        %v302 = vld [vmem:[%s250 + $0x70] sm:$0xff]
        %v303 = vld [vmem:[%s250 + $0x78] sm:$0xff]
        %v304 = vld [vmem:[%s240] ss:$4 sm:$0x3]
        %s305 = scalar_lea.vmem %s240, 1
        %v306 = vld [vmem:[%s305] ss:$4 sm:$0x3]
        %v308 = vlaneseq
        %v309 = vshrl.u32 %v308, 7
        %v310 = vsub.s32 0, %v309
        %v311 = vrot.slane %v304, %v310
        %v312 = vlaneseq
        %v313 = vshrl.u32 %v312, 7
        %v314 = vsub.s32 1, %v313
        %v315 = vrot.slane %v304, %v314
        %319 = vset.pattern.permute.xlu0 0
        %320 = vperm.xlu0 %319, %v288
        %v321 = vpop.permute.xlu0 %320
        %324 = vset.pattern.permute.xlu0 0
        %325 = vperm.xlu0 %324, %v289
        %v326 = vpop.permute.xlu0 %325
        %329 = vset.pattern.permute.xlu0 0
        %330 = vperm.xlu0 %329, %v290
        %v331 = vpop.permute.xlu0 %330
        %334 = vset.pattern.permute.xlu0 0
        %335 = vperm.xlu0 %334, %v291
        %v336 = vpop.permute.xlu0 %335
        %339 = vset.pattern.permute.xlu0 0
        %340 = vperm.xlu0 %339, %v292
        %v341 = vpop.permute.xlu0 %340
        %344 = vset.pattern.permute.xlu0 0
        %345 = vperm.xlu0 %344, %v293
        %v346 = vpop.permute.xlu0 %345
        %349 = vset.pattern.permute.xlu0 0
        %350 = vperm.xlu0 %349, %v294
        %v351 = vpop.permute.xlu0 %350
        %354 = vset.pattern.permute.xlu0 0
        %355 = vperm.xlu0 %354, %v295
        %v356 = vpop.permute.xlu0 %355
        %359 = vset.pattern.permute.xlu0 0
        %360 = vperm.xlu0 %359, %v296
        %v361 = vpop.permute.xlu0 %360
        %364 = vset.pattern.permute.xlu0 0
        %365 = vperm.xlu0 %364, %v297
        %v366 = vpop.permute.xlu0 %365
        %369 = vset.pattern.permute.xlu0 0
        %370 = vperm.xlu0 %369, %v298
        %v371 = vpop.permute.xlu0 %370
        %374 = vset.pattern.permute.xlu0 0
        %375 = vperm.xlu0 %374, %v299
        %v376 = vpop.permute.xlu0 %375
        %379 = vset.pattern.permute.xlu0 0
        %380 = vperm.xlu0 %379, %v300
        %v381 = vpop.permute.xlu0 %380
        %384 = vset.pattern.permute.xlu0 0
        %385 = vperm.xlu0 %384, %v301
        %v386 = vpop.permute.xlu0 %385
        %389 = vset.pattern.permute.xlu0 0
        %390 = vperm.xlu0 %389, %v302
        %v391 = vpop.permute.xlu0 %390
        %394 = vset.pattern.permute.xlu0 0
        %395 = vperm.xlu0 %394, %v303
        %v396 = vpop.permute.xlu0 %395
        %v398 = vsub.f32 %v311, %v321
        %v399 = vsub.f32 %v315, %v321
        %v400 = vsub.f32 %v311, %v326
        %v401 = vsub.f32 %v315, %v326
        %v402 = vsub.f32 %v311, %v331
        %v403 = vsub.f32 %v315, %v331
        %v404 = vsub.f32 %v311, %v336
        %v405 = vsub.f32 %v315, %v336
        %v406 = vsub.f32 %v311, %v341
        %v407 = vsub.f32 %v315, %v341
        %v408 = vsub.f32 %v311, %v346
        %v409 = vsub.f32 %v315, %v346
        %v410 = vsub.f32 %v311, %v351
        %v411 = vsub.f32 %v315, %v351
        %v412 = vsub.f32 %v311, %v356
        %v413 = vsub.f32 %v315, %v356
        %v414 = vsub.f32 %v311, %v361
        %v415 = vsub.f32 %v315, %v361
        %v416 = vsub.f32 %v311, %v366
        %v417 = vsub.f32 %v315, %v366
        %v418 = vsub.f32 %v311, %v371
        %v419 = vsub.f32 %v315, %v371
        %v420 = vsub.f32 %v311, %v376
        %v421 = vsub.f32 %v315, %v376
        %v422 = vsub.f32 %v311, %v381
        %v423 = vsub.f32 %v315, %v381
        %v424 = vsub.f32 %v311, %v386
        %v425 = vsub.f32 %v315, %v386
        %v426 = vsub.f32 %v311, %v391
        %v427 = vsub.f32 %v315, %v391
        %v428 = vsub.f32 %v311, %v396
        %v429 = vsub.f32 %v315, %v396
        %v431 = vlaneseq
        %v432 = vshrl.u32 %v431, 7
        %v433 = vsub.s32 0, %v432
        %v434 = vrot.slane %v306, %v433
        %v435 = vlaneseq
        %v436 = vshrl.u32 %v435, 7
        %v437 = vsub.s32 1, %v436
        %v438 = vrot.slane %v306, %v437
        %441 = vset.pattern.permute.xlu0 1
        %442 = vperm.xlu0 %441, %v288
        %v443 = vpop.permute.xlu0 %442
        %445 = vset.pattern.permute.xlu0 1
        %446 = vperm.xlu0 %445, %v289
        %v447 = vpop.permute.xlu0 %446
        %449 = vset.pattern.permute.xlu0 1
        %450 = vperm.xlu0 %449, %v290
        %v451 = vpop.permute.xlu0 %450
        %453 = vset.pattern.permute.xlu0 1
        %454 = vperm.xlu0 %453, %v291
        %v455 = vpop.permute.xlu0 %454
        %457 = vset.pattern.permute.xlu0 1
        %458 = vperm.xlu0 %457, %v292
        %v459 = vpop.permute.xlu0 %458
        %461 = vset.pattern.permute.xlu0 1
        %462 = vperm.xlu0 %461, %v293
        %v463 = vpop.permute.xlu0 %462
        %465 = vset.pattern.permute.xlu0 1
        %466 = vperm.xlu0 %465, %v294
        %v467 = vpop.permute.xlu0 %466
        %469 = vset.pattern.permute.xlu0 1
        %470 = vperm.xlu0 %469, %v295
        %v471 = vpop.permute.xlu0 %470
        %473 = vset.pattern.permute.xlu0 1
        %474 = vperm.xlu0 %473, %v296
        %v475 = vpop.permute.xlu0 %474
        %477 = vset.pattern.permute.xlu0 1
        %478 = vperm.xlu0 %477, %v297
        %v479 = vpop.permute.xlu0 %478
        %481 = vset.pattern.permute.xlu0 1
        %482 = vperm.xlu0 %481, %v298
        %v483 = vpop.permute.xlu0 %482
        %485 = vset.pattern.permute.xlu0 1
        %486 = vperm.xlu0 %485, %v299
        %v487 = vpop.permute.xlu0 %486
        %489 = vset.pattern.permute.xlu0 1
        %490 = vperm.xlu0 %489, %v300
        %v491 = vpop.permute.xlu0 %490
        %493 = vset.pattern.permute.xlu0 1
        %494 = vperm.xlu0 %493, %v301
        %v495 = vpop.permute.xlu0 %494
        %497 = vset.pattern.permute.xlu0 1
        %498 = vperm.xlu0 %497, %v302
        %v499 = vpop.permute.xlu0 %498
        %501 = vset.pattern.permute.xlu0 1
        %502 = vperm.xlu0 %501, %v303
        %v503 = vpop.permute.xlu0 %502
        %v505 = vsub.f32 %v434, %v443
        %v506 = vsub.f32 %v438, %v443
        %v507 = vsub.f32 %v434, %v447
        %v508 = vsub.f32 %v438, %v447
        %v509 = vsub.f32 %v434, %v451
        %v510 = vsub.f32 %v438, %v451
        %v511 = vsub.f32 %v434, %v455
        %v512 = vsub.f32 %v438, %v455
        %v513 = vsub.f32 %v434, %v459
        %v514 = vsub.f32 %v438, %v459
        %v515 = vsub.f32 %v434, %v463
        %v516 = vsub.f32 %v438, %v463
        %v517 = vsub.f32 %v434, %v467
        %v518 = vsub.f32 %v438, %v467
        %v519 = vsub.f32 %v434, %v471
        %v520 = vsub.f32 %v438, %v471
        %v521 = vsub.f32 %v434, %v475
        %v522 = vsub.f32 %v438, %v475
        %v523 = vsub.f32 %v434, %v479
        %v524 = vsub.f32 %v438, %v479
        %v525 = vsub.f32 %v434, %v483
        %v526 = vsub.f32 %v438, %v483
        %v527 = vsub.f32 %v434, %v487
        %v528 = vsub.f32 %v438, %v487
        %v529 = vsub.f32 %v434, %v491
        %v530 = vsub.f32 %v438, %v491
        %v531 = vsub.f32 %v434, %v495
        %v532 = vsub.f32 %v438, %v495
        %v533 = vsub.f32 %v434, %v499
        %v534 = vsub.f32 %v438, %v499
        %v535 = vsub.f32 %v434, %v503
        %v536 = vsub.f32 %v438, %v503
        %v537 = vmul.f32 %v398, %v398
        %v538 = vmul.f32 %v399, %v399
        %v539 = vmul.f32 %v400, %v400
        %v540 = vmul.f32 %v401, %v401
        %v541 = vmul.f32 %v402, %v402
        %v542 = vmul.f32 %v403, %v403
        %v543 = vmul.f32 %v404, %v404
        %v544 = vmul.f32 %v405, %v405
        %v545 = vmul.f32 %v406, %v406
        %v546 = vmul.f32 %v407, %v407
        %v547 = vmul.f32 %v408, %v408
        %v548 = vmul.f32 %v409, %v409
        %v549 = vmul.f32 %v410, %v410
        %v550 = vmul.f32 %v411, %v411
        %v551 = vmul.f32 %v412, %v412
        %v552 = vmul.f32 %v413, %v413
        %v553 = vmul.f32 %v414, %v414
        %v554 = vmul.f32 %v415, %v415
        %v555 = vmul.f32 %v416, %v416
        %v556 = vmul.f32 %v417, %v417
        %v557 = vmul.f32 %v418, %v418
        %v558 = vmul.f32 %v419, %v419
        %v559 = vmul.f32 %v420, %v420
        %v560 = vmul.f32 %v421, %v421
        %v561 = vmul.f32 %v422, %v422
        %v562 = vmul.f32 %v423, %v423
        %v563 = vmul.f32 %v424, %v424
        %v564 = vmul.f32 %v425, %v425
        %v565 = vmul.f32 %v426, %v426
        %v566 = vmul.f32 %v427, %v427
        %v567 = vmul.f32 %v428, %v428
        %v568 = vmul.f32 %v429, %v429
        %569 = vset.pattern.permute.xlu0 2
        %570 = vperm.xlu0 %569, %v288
        %v571 = vpop.permute.xlu0 %570
        %573 = vset.pattern.permute.xlu0 2
        %574 = vperm.xlu0 %573, %v289
        %v575 = vpop.permute.xlu0 %574
        %577 = vset.pattern.permute.xlu0 2
        %578 = vperm.xlu0 %577, %v290
        %v579 = vpop.permute.xlu0 %578
        %581 = vset.pattern.permute.xlu0 2
        %582 = vperm.xlu0 %581, %v291
        %v583 = vpop.permute.xlu0 %582
        %585 = vset.pattern.permute.xlu0 2
        %586 = vperm.xlu0 %585, %v292
        %v587 = vpop.permute.xlu0 %586
        %589 = vset.pattern.permute.xlu0 2
        %590 = vperm.xlu0 %589, %v293
        %v591 = vpop.permute.xlu0 %590
        %593 = vset.pattern.permute.xlu0 2
        %594 = vperm.xlu0 %593, %v294
        %v595 = vpop.permute.xlu0 %594
        %597 = vset.pattern.permute.xlu0 2
        %598 = vperm.xlu0 %597, %v295
        %v599 = vpop.permute.xlu0 %598
        %601 = vset.pattern.permute.xlu0 2
        %602 = vperm.xlu0 %601, %v296
        %v603 = vpop.permute.xlu0 %602
        %605 = vset.pattern.permute.xlu0 2
        %606 = vperm.xlu0 %605, %v297
        %v607 = vpop.permute.xlu0 %606
        %609 = vset.pattern.permute.xlu0 2
        %610 = vperm.xlu0 %609, %v298
        %v611 = vpop.permute.xlu0 %610
        %613 = vset.pattern.permute.xlu0 2
        %614 = vperm.xlu0 %613, %v299
        %v615 = vpop.permute.xlu0 %614
        %617 = vset.pattern.permute.xlu0 2
        %618 = vperm.xlu0 %617, %v300
        %v619 = vpop.permute.xlu0 %618
        %621 = vset.pattern.permute.xlu0 2
        %622 = vperm.xlu0 %621, %v301
        %v623 = vpop.permute.xlu0 %622
        %625 = vset.pattern.permute.xlu0 2
        %626 = vperm.xlu0 %625, %v302
        %v627 = vpop.permute.xlu0 %626
        %629 = vset.pattern.permute.xlu0 2
        %630 = vperm.xlu0 %629, %v303
        %v631 = vpop.permute.xlu0 %630
        %v633 = vmul.f32 %v571, %v537
        %v634 = vmul.f32 %v571, %v538
        %v635 = vmul.f32 %v575, %v539
        %v636 = vmul.f32 %v575, %v540
        %v637 = vmul.f32 %v579, %v541
        %v638 = vmul.f32 %v579, %v542
        %v639 = vmul.f32 %v583, %v543
        %v640 = vmul.f32 %v583, %v544
        %v641 = vmul.f32 %v587, %v545
        %v642 = vmul.f32 %v587, %v546
        %v643 = vmul.f32 %v591, %v547
        %v644 = vmul.f32 %v591, %v548
        %v645 = vmul.f32 %v595, %v549
        %v646 = vmul.f32 %v595, %v550
        %v647 = vmul.f32 %v599, %v551
        %v648 = vmul.f32 %v599, %v552
        %v649 = vmul.f32 %v603, %v553
        %v650 = vmul.f32 %v603, %v554
        %v651 = vmul.f32 %v607, %v555
        %v652 = vmul.f32 %v607, %v556
        %v653 = vmul.f32 %v611, %v557
        %v654 = vmul.f32 %v611, %v558
        %v655 = vmul.f32 %v615, %v559
        %v656 = vmul.f32 %v615, %v560
        %v657 = vmul.f32 %v619, %v561
        %v658 = vmul.f32 %v619, %v562
        %v659 = vmul.f32 %v623, %v563
        %v660 = vmul.f32 %v623, %v564
        %v661 = vmul.f32 %v627, %v565
        %v662 = vmul.f32 %v627, %v566
        %v663 = vmul.f32 %v631, %v567
        %v664 = vmul.f32 %v631, %v568
        %v665 = vmul.f32 %v398, %v505
        %v666 = vmul.f32 %v399, %v506
        %v667 = vmul.f32 %v400, %v507
        %v668 = vmul.f32 %v401, %v508
        %v669 = vmul.f32 %v402, %v509
        %v670 = vmul.f32 %v403, %v510
        %v671 = vmul.f32 %v404, %v511
        %v672 = vmul.f32 %v405, %v512
        %v673 = vmul.f32 %v406, %v513
        %v674 = vmul.f32 %v407, %v514
        %v675 = vmul.f32 %v408, %v515
        %v676 = vmul.f32 %v409, %v516
        %v677 = vmul.f32 %v410, %v517
        %v678 = vmul.f32 %v411, %v518
        %v679 = vmul.f32 %v412, %v519
        %v680 = vmul.f32 %v413, %v520
        %v681 = vmul.f32 %v414, %v521
        %v682 = vmul.f32 %v415, %v522
        %v683 = vmul.f32 %v416, %v523
        %v684 = vmul.f32 %v417, %v524
        %v685 = vmul.f32 %v418, %v525
        %v686 = vmul.f32 %v419, %v526
        %v687 = vmul.f32 %v420, %v527
        %v688 = vmul.f32 %v421, %v528
        %v689 = vmul.f32 %v422, %v529
        %v690 = vmul.f32 %v423, %v530
        %v691 = vmul.f32 %v424, %v531
        %v692 = vmul.f32 %v425, %v532
        %v693 = vmul.f32 %v426, %v533
        %v694 = vmul.f32 %v427, %v534
        %v695 = vmul.f32 %v428, %v535
        %v696 = vmul.f32 %v429, %v536
        %697 = vset.pattern.permute.xlu0 3
        %698 = vperm.xlu0 %697, %v288
        %v699 = vpop.permute.xlu0 %698
        %701 = vset.pattern.permute.xlu0 3
        %702 = vperm.xlu0 %701, %v289
        %v703 = vpop.permute.xlu0 %702
        %705 = vset.pattern.permute.xlu0 3
        %706 = vperm.xlu0 %705, %v290
        %v707 = vpop.permute.xlu0 %706
        %709 = vset.pattern.permute.xlu0 3
        %710 = vperm.xlu0 %709, %v291
        %v711 = vpop.permute.xlu0 %710
        %713 = vset.pattern.permute.xlu0 3
        %714 = vperm.xlu0 %713, %v292
        %v715 = vpop.permute.xlu0 %714
        %717 = vset.pattern.permute.xlu0 3
        %718 = vperm.xlu0 %717, %v293
        %v719 = vpop.permute.xlu0 %718
        %721 = vset.pattern.permute.xlu0 3
        %722 = vperm.xlu0 %721, %v294
        %v723 = vpop.permute.xlu0 %722
        %725 = vset.pattern.permute.xlu0 3
        %726 = vperm.xlu0 %725, %v295
        %v727 = vpop.permute.xlu0 %726
        %729 = vset.pattern.permute.xlu0 3
        %730 = vperm.xlu0 %729, %v296
        %v731 = vpop.permute.xlu0 %730
        %733 = vset.pattern.permute.xlu0 3
        %734 = vperm.xlu0 %733, %v297
        %v735 = vpop.permute.xlu0 %734
        %737 = vset.pattern.permute.xlu0 3
        %738 = vperm.xlu0 %737, %v298
        %v739 = vpop.permute.xlu0 %738
        %741 = vset.pattern.permute.xlu0 3
        %742 = vperm.xlu0 %741, %v299
        %v743 = vpop.permute.xlu0 %742
        %745 = vset.pattern.permute.xlu0 3
        %746 = vperm.xlu0 %745, %v300
        %v747 = vpop.permute.xlu0 %746
        %749 = vset.pattern.permute.xlu0 3
        %750 = vperm.xlu0 %749, %v301
        %v751 = vpop.permute.xlu0 %750
        %753 = vset.pattern.permute.xlu0 3
        %754 = vperm.xlu0 %753, %v302
        %v755 = vpop.permute.xlu0 %754
        %757 = vset.pattern.permute.xlu0 3
        %758 = vperm.xlu0 %757, %v303
        %v759 = vpop.permute.xlu0 %758
        %v761 = vmul.f32 %v699, %v665
        %v762 = vmul.f32 %v699, %v666
        %v763 = vmul.f32 %v703, %v667
        %v764 = vmul.f32 %v703, %v668
        %v765 = vmul.f32 %v707, %v669
        %v766 = vmul.f32 %v707, %v670
        %v767 = vmul.f32 %v711, %v671
        %v768 = vmul.f32 %v711, %v672
        %v769 = vmul.f32 %v715, %v673
        %v770 = vmul.f32 %v715, %v674
        %v771 = vmul.f32 %v719, %v675
        %v772 = vmul.f32 %v719, %v676
        %v773 = vmul.f32 %v723, %v677
        %v774 = vmul.f32 %v723, %v678
        %v775 = vmul.f32 %v727, %v679
        %v776 = vmul.f32 %v727, %v680
        %v777 = vmul.f32 %v731, %v681
        %v778 = vmul.f32 %v731, %v682
        %v779 = vmul.f32 %v735, %v683
        %v780 = vmul.f32 %v735, %v684
        %v781 = vmul.f32 %v739, %v685
        %v782 = vmul.f32 %v739, %v686
        %v783 = vmul.f32 %v743, %v687
        %v784 = vmul.f32 %v743, %v688
        %v785 = vmul.f32 %v747, %v689
        %v786 = vmul.f32 %v747, %v690
        %v787 = vmul.f32 %v751, %v691
        %v788 = vmul.f32 %v751, %v692
        %v789 = vmul.f32 %v755, %v693
        %v790 = vmul.f32 %v755, %v694
        %v791 = vmul.f32 %v759, %v695
        %v792 = vmul.f32 %v759, %v696
        %v793 = vadd.f32 %v633, %v761
        %v794 = vadd.f32 %v634, %v762
        %v795 = vadd.f32 %v635, %v763
        %v796 = vadd.f32 %v636, %v764
        %v797 = vadd.f32 %v637, %v765
        %v798 = vadd.f32 %v638, %v766
        %v799 = vadd.f32 %v639, %v767
        %v800 = vadd.f32 %v640, %v768
        %v801 = vadd.f32 %v641, %v769
        %v802 = vadd.f32 %v642, %v770
        %v803 = vadd.f32 %v643, %v771
        %v804 = vadd.f32 %v644, %v772
        %v805 = vadd.f32 %v645, %v773
        %v806 = vadd.f32 %v646, %v774
        %v807 = vadd.f32 %v647, %v775
        %v808 = vadd.f32 %v648, %v776
        %v809 = vadd.f32 %v649, %v777
        %v810 = vadd.f32 %v650, %v778
        %v811 = vadd.f32 %v651, %v779
        %v812 = vadd.f32 %v652, %v780
        %v813 = vadd.f32 %v653, %v781
        %v814 = vadd.f32 %v654, %v782
        %v815 = vadd.f32 %v655, %v783
        %v816 = vadd.f32 %v656, %v784
        %v817 = vadd.f32 %v657, %v785
        %v818 = vadd.f32 %v658, %v786
        %v819 = vadd.f32 %v659, %v787
        %v820 = vadd.f32 %v660, %v788
        %v821 = vadd.f32 %v661, %v789
        %v822 = vadd.f32 %v662, %v790
        %v823 = vadd.f32 %v663, %v791
        %v824 = vadd.f32 %v664, %v792
        %v825 = vmul.f32 %v505, %v505
        %v826 = vmul.f32 %v506, %v506
        %v827 = vmul.f32 %v507, %v507
        %v828 = vmul.f32 %v508, %v508
        %v829 = vmul.f32 %v509, %v509
        %v830 = vmul.f32 %v510, %v510
        %v831 = vmul.f32 %v511, %v511
        %v832 = vmul.f32 %v512, %v512
        %v833 = vmul.f32 %v513, %v513
        %v834 = vmul.f32 %v514, %v514
        %v835 = vmul.f32 %v515, %v515
        %v836 = vmul.f32 %v516, %v516
        %v837 = vmul.f32 %v517, %v517
        %v838 = vmul.f32 %v518, %v518
        %v839 = vmul.f32 %v519, %v519
        %v840 = vmul.f32 %v520, %v520
        %v841 = vmul.f32 %v521, %v521
        %v842 = vmul.f32 %v522, %v522
        %v843 = vmul.f32 %v523, %v523
        %v844 = vmul.f32 %v524, %v524
        %v845 = vmul.f32 %v525, %v525
        %v846 = vmul.f32 %v526, %v526
        %v847 = vmul.f32 %v527, %v527
        %v848 = vmul.f32 %v528, %v528
        %v849 = vmul.f32 %v529, %v529
        %v850 = vmul.f32 %v530, %v530
        %v851 = vmul.f32 %v531, %v531
        %v852 = vmul.f32 %v532, %v532
        %v853 = vmul.f32 %v533, %v533
        %v854 = vmul.f32 %v534, %v534
        %v855 = vmul.f32 %v535, %v535
        %v856 = vmul.f32 %v536, %v536
        %857 = vset.pattern.permute.xlu0 4
        %858 = vperm.xlu0 %857, %v288
        %v859 = vpop.permute.xlu0 %858
        %861 = vset.pattern.permute.xlu0 4
        %862 = vperm.xlu0 %861, %v289
        %v863 = vpop.permute.xlu0 %862
        %865 = vset.pattern.permute.xlu0 4
        %866 = vperm.xlu0 %865, %v290
        %v867 = vpop.permute.xlu0 %866
        %869 = vset.pattern.permute.xlu0 4
        %870 = vperm.xlu0 %869, %v291
        %v871 = vpop.permute.xlu0 %870
        %873 = vset.pattern.permute.xlu0 4
        %874 = vperm.xlu0 %873, %v292
        %v875 = vpop.permute.xlu0 %874
        %877 = vset.pattern.permute.xlu0 4
        %878 = vperm.xlu0 %877, %v293
        %v879 = vpop.permute.xlu0 %878
        %881 = vset.pattern.permute.xlu0 4
        %882 = vperm.xlu0 %881, %v294
        %v883 = vpop.permute.xlu0 %882
        %885 = vset.pattern.permute.xlu0 4
        %886 = vperm.xlu0 %885, %v295
        %v887 = vpop.permute.xlu0 %886
        %889 = vset.pattern.permute.xlu0 4
        %890 = vperm.xlu0 %889, %v296
        %v891 = vpop.permute.xlu0 %890
        %893 = vset.pattern.permute.xlu0 4
        %894 = vperm.xlu0 %893, %v297
        %v895 = vpop.permute.xlu0 %894
        %897 = vset.pattern.permute.xlu0 4
        %898 = vperm.xlu0 %897, %v298
        %v899 = vpop.permute.xlu0 %898
        %901 = vset.pattern.permute.xlu0 4
        %902 = vperm.xlu0 %901, %v299
        %v903 = vpop.permute.xlu0 %902
        %905 = vset.pattern.permute.xlu0 4
        %906 = vperm.xlu0 %905, %v300
        %v907 = vpop.permute.xlu0 %906
        %909 = vset.pattern.permute.xlu0 4
        %910 = vperm.xlu0 %909, %v301
        %v911 = vpop.permute.xlu0 %910
        %913 = vset.pattern.permute.xlu0 4
        %914 = vperm.xlu0 %913, %v302
        %v915 = vpop.permute.xlu0 %914
        %917 = vset.pattern.permute.xlu0 4
        %918 = vperm.xlu0 %917, %v303
        %v919 = vpop.permute.xlu0 %918
        %v921 = vmul.f32 %v859, %v825
        %v922 = vmul.f32 %v859, %v826
        %v923 = vmul.f32 %v863, %v827
        %v924 = vmul.f32 %v863, %v828
        %v925 = vmul.f32 %v867, %v829
        %v926 = vmul.f32 %v867, %v830
        %v927 = vmul.f32 %v871, %v831
        %v928 = vmul.f32 %v871, %v832
        %v929 = vmul.f32 %v875, %v833
        %v930 = vmul.f32 %v875, %v834
        %v931 = vmul.f32 %v879, %v835
        %v932 = vmul.f32 %v879, %v836
        %v933 = vmul.f32 %v883, %v837
        %v934 = vmul.f32 %v883, %v838
        %v935 = vmul.f32 %v887, %v839
        %v936 = vmul.f32 %v887, %v840
        %v937 = vmul.f32 %v891, %v841
        %v938 = vmul.f32 %v891, %v842
        %v939 = vmul.f32 %v895, %v843
        %v940 = vmul.f32 %v895, %v844
        %v941 = vmul.f32 %v899, %v845
        %v942 = vmul.f32 %v899, %v846
        %v943 = vmul.f32 %v903, %v847
        %v944 = vmul.f32 %v903, %v848
        %v945 = vmul.f32 %v907, %v849
        %v946 = vmul.f32 %v907, %v850
        %v947 = vmul.f32 %v911, %v851
        %v948 = vmul.f32 %v911, %v852
        %v949 = vmul.f32 %v915, %v853
        %v950 = vmul.f32 %v915, %v854
        %v951 = vmul.f32 %v919, %v855
        %v952 = vmul.f32 %v919, %v856
        %v953 = vadd.f32 %v793, %v921
        %v954 = vadd.f32 %v794, %v922
        %v955 = vadd.f32 %v795, %v923
        %v956 = vadd.f32 %v796, %v924
        %v957 = vadd.f32 %v797, %v925
        %v958 = vadd.f32 %v798, %v926
        %v959 = vadd.f32 %v799, %v927
        %v960 = vadd.f32 %v800, %v928
        %v961 = vadd.f32 %v801, %v929
        %v962 = vadd.f32 %v802, %v930
        %v963 = vadd.f32 %v803, %v931
        %v964 = vadd.f32 %v804, %v932
        %v965 = vadd.f32 %v805, %v933
        %v966 = vadd.f32 %v806, %v934
        %v967 = vadd.f32 %v807, %v935
        %v968 = vadd.f32 %v808, %v936
        %v969 = vadd.f32 %v809, %v937
        %v970 = vadd.f32 %v810, %v938
        %v971 = vadd.f32 %v811, %v939
        %v972 = vadd.f32 %v812, %v940
        %v973 = vadd.f32 %v813, %v941
        %v974 = vadd.f32 %v814, %v942
        %v975 = vadd.f32 %v815, %v943
        %v976 = vadd.f32 %v816, %v944
        %v977 = vadd.f32 %v817, %v945
        %v978 = vadd.f32 %v818, %v946
        %v979 = vadd.f32 %v819, %v947
        %v980 = vadd.f32 %v820, %v948
        %v981 = vadd.f32 %v821, %v949
        %v982 = vadd.f32 %v822, %v950
        %v983 = vadd.f32 %v823, %v951
        %v984 = vadd.f32 %v824, %v952
        %v985 = vmul.f32 %v953, 1.442695
        %v986 = vpow.pop %v985
        %v987 = vmul.f32 %v954, 1.442695
        %v988 = vpow.pop %v987
        %v989 = vmul.f32 %v955, 1.442695
        %v990 = vpow.pop %v989
        %v991 = vmul.f32 %v956, 1.442695
        %v992 = vpow.pop %v991
        %v993 = vmul.f32 %v957, 1.442695
        %v994 = vpow.pop %v993
        %v995 = vmul.f32 %v958, 1.442695
        %v996 = vpow.pop %v995
        %v997 = vmul.f32 %v959, 1.442695
        %v998 = vpow.pop %v997
        %v999 = vmul.f32 %v960, 1.442695
        %v1000 = vpow.pop %v999
        %v1001 = vmul.f32 %v961, 1.442695
        %v1002 = vpow.pop %v1001
        %v1003 = vmul.f32 %v962, 1.442695
        %v1004 = vpow.pop %v1003
        %v1005 = vmul.f32 %v963, 1.442695
        %v1006 = vpow.pop %v1005
        %v1007 = vmul.f32 %v964, 1.442695
        %v1008 = vpow.pop %v1007
        %v1009 = vmul.f32 %v965, 1.442695
        %v1010 = vpow.pop %v1009
        %v1011 = vmul.f32 %v966, 1.442695
        %v1012 = vpow.pop %v1011
        %v1013 = vmul.f32 %v967, 1.442695
        %v1014 = vpow.pop %v1013
        %v1015 = vmul.f32 %v968, 1.442695
        %v1016 = vpow.pop %v1015
        %v1017 = vmul.f32 %v969, 1.442695
        %v1018 = vpow.pop %v1017
        %v1019 = vmul.f32 %v970, 1.442695
        %v1020 = vpow.pop %v1019
        %v1021 = vmul.f32 %v971, 1.442695
        %v1022 = vpow.pop %v1021
        %v1023 = vmul.f32 %v972, 1.442695
        %v1024 = vpow.pop %v1023
        %v1025 = vmul.f32 %v973, 1.442695
        %v1026 = vpow.pop %v1025
        %v1027 = vmul.f32 %v974, 1.442695
        %v1028 = vpow.pop %v1027
        %v1029 = vmul.f32 %v975, 1.442695
        %v1030 = vpow.pop %v1029
        %v1031 = vmul.f32 %v976, 1.442695
        %v1032 = vpow.pop %v1031
        %v1033 = vmul.f32 %v977, 1.442695
        %v1034 = vpow.pop %v1033
        %v1035 = vmul.f32 %v978, 1.442695
        %v1036 = vpow.pop %v1035
        %v1037 = vmul.f32 %v979, 1.442695
        %v1038 = vpow.pop %v1037
        %v1039 = vmul.f32 %v980, 1.442695
        %v1040 = vpow.pop %v1039
        %v1041 = vmul.f32 %v981, 1.442695
        %v1042 = vpow.pop %v1041
        %v1043 = vmul.f32 %v982, 1.442695
        %v1044 = vpow.pop %v1043
        %v1045 = vmul.f32 %v983, 1.442695
        %v1046 = vpow.pop %v1045
        %v1047 = vmul.f32 %v984, 1.442695
        %v1048 = vpow.pop %v1047
        %1049 = vset.pattern.permute.xlu0 5
        %1050 = vperm.xlu0 %1049, %v288
        %v1051 = vpop.permute.xlu0 %1050
        %1053 = vset.pattern.permute.xlu0 5
        %1054 = vperm.xlu0 %1053, %v289
        %v1055 = vpop.permute.xlu0 %1054
        %1057 = vset.pattern.permute.xlu0 5
        %1058 = vperm.xlu0 %1057, %v290
        %v1059 = vpop.permute.xlu0 %1058
        %1061 = vset.pattern.permute.xlu0 5
        %1062 = vperm.xlu0 %1061, %v291
        %v1063 = vpop.permute.xlu0 %1062
        %1065 = vset.pattern.permute.xlu0 5
        %1066 = vperm.xlu0 %1065, %v292
        %v1067 = vpop.permute.xlu0 %1066
        %1069 = vset.pattern.permute.xlu0 5
        %1070 = vperm.xlu0 %1069, %v293
        %v1071 = vpop.permute.xlu0 %1070
        %1073 = vset.pattern.permute.xlu0 5
        %1074 = vperm.xlu0 %1073, %v294
        %v1075 = vpop.permute.xlu0 %1074
        %1077 = vset.pattern.permute.xlu0 5
        %1078 = vperm.xlu0 %1077, %v295
        %v1079 = vpop.permute.xlu0 %1078
        %1081 = vset.pattern.permute.xlu0 5
        %1082 = vperm.xlu0 %1081, %v296
        %v1083 = vpop.permute.xlu0 %1082
        %1085 = vset.pattern.permute.xlu0 5
        %1086 = vperm.xlu0 %1085, %v297
        %v1087 = vpop.permute.xlu0 %1086
        %1089 = vset.pattern.permute.xlu0 5
        %1090 = vperm.xlu0 %1089, %v298
        %v1091 = vpop.permute.xlu0 %1090
        %1093 = vset.pattern.permute.xlu0 5
        %1094 = vperm.xlu0 %1093, %v299
        %v1095 = vpop.permute.xlu0 %1094
        %1097 = vset.pattern.permute.xlu0 5
        %1098 = vperm.xlu0 %1097, %v300
        %v1099 = vpop.permute.xlu0 %1098
        %1101 = vset.pattern.permute.xlu0 5
        %1102 = vperm.xlu0 %1101, %v301
        %v1103 = vpop.permute.xlu0 %1102
        %1105 = vset.pattern.permute.xlu0 5
        %1106 = vperm.xlu0 %1105, %v302
        %v1107 = vpop.permute.xlu0 %1106
        %1109 = vset.pattern.permute.xlu0 5
        %1110 = vperm.xlu0 %1109, %v303
        %v1111 = vpop.permute.xlu0 %1110
        %v1113 = vmul.f32 %v986, %v1051
        %v1114 = vmul.f32 %v988, %v1051
        %v1115 = vmul.f32 %v990, %v1055
        %v1116 = vmul.f32 %v992, %v1055
        %v1117 = vmul.f32 %v994, %v1059
        %v1118 = vmul.f32 %v996, %v1059
        %v1119 = vmul.f32 %v998, %v1063
        %v1120 = vmul.f32 %v1000, %v1063
        %v1121 = vmul.f32 %v1002, %v1067
        %v1122 = vmul.f32 %v1004, %v1067
        %v1123 = vmul.f32 %v1006, %v1071
        %v1124 = vmul.f32 %v1008, %v1071
        %v1125 = vmul.f32 %v1010, %v1075
        %v1126 = vmul.f32 %v1012, %v1075
        %v1127 = vmul.f32 %v1014, %v1079
        %v1128 = vmul.f32 %v1016, %v1079
        %v1129 = vmul.f32 %v1018, %v1083
        %v1130 = vmul.f32 %v1020, %v1083
        %v1131 = vmul.f32 %v1022, %v1087
        %v1132 = vmul.f32 %v1024, %v1087
        %v1133 = vmul.f32 %v1026, %v1091
        %v1134 = vmul.f32 %v1028, %v1091
        %v1135 = vmul.f32 %v1030, %v1095
        %v1136 = vmul.f32 %v1032, %v1095
        %v1137 = vmul.f32 %v1034, %v1099
        %v1138 = vmul.f32 %v1036, %v1099
        %v1139 = vmul.f32 %v1038, %v1103
        %v1140 = vmul.f32 %v1040, %v1103
        %v1141 = vmul.f32 %v1042, %v1107
        %v1142 = vmul.f32 %v1044, %v1107
        %v1143 = vmul.f32 %v1046, %v1111
        %v1144 = vmul.f32 %v1048, %v1111
        %v1145 = vsub.f32 1.0, %v1113
        %v1146 = vsub.f32 1.0, %v1114
        %v1147 = vsub.f32 1.0, %v1115
        %v1148 = vsub.f32 1.0, %v1116
        %v1149 = vsub.f32 1.0, %v1117
        %v1150 = vsub.f32 1.0, %v1118
        %v1151 = vsub.f32 1.0, %v1119
        %v1152 = vsub.f32 1.0, %v1120
        %v1153 = vsub.f32 1.0, %v1121
        %v1154 = vsub.f32 1.0, %v1122
        %v1155 = vsub.f32 1.0, %v1123
        %v1156 = vsub.f32 1.0, %v1124
        %v1157 = vsub.f32 1.0, %v1125
        %v1158 = vsub.f32 1.0, %v1126
        %v1159 = vsub.f32 1.0, %v1127
        %v1160 = vsub.f32 1.0, %v1128
        %v1161 = vsub.f32 1.0, %v1129
        %v1162 = vsub.f32 1.0, %v1130
        %v1163 = vsub.f32 1.0, %v1131
        %v1164 = vsub.f32 1.0, %v1132
        %v1165 = vsub.f32 1.0, %v1133
        %v1166 = vsub.f32 1.0, %v1134
        %v1167 = vsub.f32 1.0, %v1135
        %v1168 = vsub.f32 1.0, %v1136
        %v1169 = vsub.f32 1.0, %v1137
        %v1170 = vsub.f32 1.0, %v1138
        %v1171 = vsub.f32 1.0, %v1139
        %v1172 = vsub.f32 1.0, %v1140
        %v1173 = vsub.f32 1.0, %v1141
        %v1174 = vsub.f32 1.0, %v1142
        %v1175 = vsub.f32 1.0, %v1143
        %v1176 = vsub.f32 1.0, %v1144
        %v1177 = vlaneseq
        %v1178 = vshrl.u32 %v1177, 7
        %v1179 = vadd.s32 %v1178, 8
        %v1180 = vadd.s32 %v1178, 16
        %v1181 = vadd.s32 %v1178, 24
        %v1182 = vadd.s32 %v1178, 32
        %v1183 = vadd.s32 %v1178, 40
        %v1184 = vadd.s32 %v1178, 48
        %v1185 = vadd.s32 %v1178, 56
        %v1186 = vadd.s32 %v1178, 64
        %v1187 = vadd.s32 %v1178, 72
        %v1188 = vadd.s32 %v1178, 80
        %v1189 = vadd.s32 %v1178, 88
        %v1190 = vadd.s32 %v1178, 96
        %v1191 = vadd.s32 %v1178, 104
        %v1192 = vadd.s32 %v1178, 112
        %v1193 = vadd.s32 %v1178, 120
        %vm1194 = vcmp.ge.s32.totalorder %v1178, 1
        %vm1195 = vcmp.ge.s32.totalorder %v1179, 1
        %vm1196 = vcmp.ge.s32.totalorder %v1180, 1
        %vm1197 = vcmp.ge.s32.totalorder %v1181, 1
        %vm1198 = vcmp.ge.s32.totalorder %v1182, 1
        %vm1199 = vcmp.ge.s32.totalorder %v1183, 1
        %vm1200 = vcmp.ge.s32.totalorder %v1184, 1
        %vm1201 = vcmp.ge.s32.totalorder %v1185, 1
        %vm1202 = vcmp.ge.s32.totalorder %v1186, 1
        %vm1203 = vcmp.ge.s32.totalorder %v1187, 1
        %vm1204 = vcmp.ge.s32.totalorder %v1188, 1
        %vm1205 = vcmp.ge.s32.totalorder %v1189, 1
        %vm1206 = vcmp.ge.s32.totalorder %v1190, 1
        %vm1207 = vcmp.ge.s32.totalorder %v1191, 1
        %vm1208 = vcmp.ge.s32.totalorder %v1192, 1
        %vm1209 = vcmp.ge.s32.totalorder %v1193, 1
        %v1210 = vsel %vm1194, 1, 0
        %v1211 = vsel %vm1195, 1, 0
        %v1212 = vsel %vm1196, 1, 0
        %v1213 = vsel %vm1197, 1, 0
        %v1214 = vsel %vm1198, 1, 0
        %v1215 = vsel %vm1199, 1, 0
        %v1216 = vsel %vm1200, 1, 0
        %v1217 = vsel %vm1201, 1, 0
        %v1218 = vsel %vm1202, 1, 0
        %v1219 = vsel %vm1203, 1, 0
        %v1220 = vsel %vm1204, 1, 0
        %v1221 = vsel %vm1205, 1, 0
        %v1222 = vsel %vm1206, 1, 0
        %v1223 = vsel %vm1207, 1, 0
        %v1224 = vsel %vm1208, 1, 0
        %v1225 = vsel %vm1209, 1, 0
        %v1226 = vcvt.s32.f32 %v1210
        %v1227 = vcvt.s32.f32 %v1211
        %v1228 = vcvt.s32.f32 %v1212
        %v1229 = vcvt.s32.f32 %v1213
        %v1230 = vcvt.s32.f32 %v1214
        %v1231 = vcvt.s32.f32 %v1215
        %v1232 = vcvt.s32.f32 %v1216
        %v1233 = vcvt.s32.f32 %v1217
        %v1234 = vcvt.s32.f32 %v1218
        %v1235 = vcvt.s32.f32 %v1219
        %v1236 = vcvt.s32.f32 %v1220
        %v1237 = vcvt.s32.f32 %v1221
        %v1238 = vcvt.s32.f32 %v1222
        %v1239 = vcvt.s32.f32 %v1223
        %v1240 = vcvt.s32.f32 %v1224
        %v1241 = vcvt.s32.f32 %v1225
        %v1242 = vrot.slane %v1145, 7
        %v1243 = vrot.slane %v1146, 7
        %v1244 = vrot.slane %v1147, 7
        %v1245 = vrot.slane %v1148, 7
        %v1246 = vrot.slane %v1149, 7
        %v1247 = vrot.slane %v1150, 7
        %v1248 = vrot.slane %v1151, 7
        %v1249 = vrot.slane %v1152, 7
        %v1250 = vrot.slane %v1153, 7
        %v1251 = vrot.slane %v1154, 7
        %v1252 = vrot.slane %v1155, 7
        %v1253 = vrot.slane %v1156, 7
        %v1254 = vrot.slane %v1157, 7
        %v1255 = vrot.slane %v1158, 7
        %v1256 = vrot.slane %v1159, 7
        %v1257 = vrot.slane %v1160, 7
        %v1258 = vrot.slane %v1161, 7
        %v1259 = vrot.slane %v1162, 7
        %v1260 = vrot.slane %v1163, 7
        %v1261 = vrot.slane %v1164, 7
        %v1262 = vrot.slane %v1165, 7
        %v1263 = vrot.slane %v1166, 7
        %v1264 = vrot.slane %v1167, 7
        %v1265 = vrot.slane %v1168, 7
        %v1266 = vrot.slane %v1169, 7
        %v1267 = vrot.slane %v1170, 7
        %v1268 = vrot.slane %v1171, 7
        %v1269 = vrot.slane %v1172, 7
        %v1270 = vrot.slane %v1173, 7
        %v1271 = vrot.slane %v1174, 7
        %v1272 = vrot.slane %v1175, 7
        %v1273 = vrot.slane %v1176, 7
        %vm1274 = vcmp.lt.s32.totalorder %v1178, 1
        %v1275 = vsel %vm1274, %v1270, %v1272
        %v1276 = vsel %vm1274, %v1271, %v1273
        %v1277 = vsel %vm1274, %v1268, %v1270
        %v1278 = vsel %vm1274, %v1269, %v1271
        %v1279 = vsel %vm1274, %v1266, %v1268
        %v1280 = vsel %vm1274, %v1267, %v1269
        %v1281 = vsel %vm1274, %v1264, %v1266
        %v1282 = vsel %vm1274, %v1265, %v1267
        %v1283 = vsel %vm1274, %v1262, %v1264
        %v1284 = vsel %vm1274, %v1263, %v1265
        %v1285 = vsel %vm1274, %v1260, %v1262
        %v1286 = vsel %vm1274, %v1261, %v1263
        %v1287 = vsel %vm1274, %v1258, %v1260
        %v1288 = vsel %vm1274, %v1259, %v1261
        %v1289 = vsel %vm1274, %v1256, %v1258
        %v1290 = vsel %vm1274, %v1257, %v1259
        %v1291 = vsel %vm1274, %v1254, %v1256
        %v1292 = vsel %vm1274, %v1255, %v1257
        %v1293 = vsel %vm1274, %v1252, %v1254
        %v1294 = vsel %vm1274, %v1253, %v1255
        %v1295 = vsel %vm1274, %v1250, %v1252
        %v1296 = vsel %vm1274, %v1251, %v1253
        %v1297 = vsel %vm1274, %v1248, %v1250
        %v1298 = vsel %vm1274, %v1249, %v1251
        %v1299 = vsel %vm1274, %v1246, %v1248
        %v1300 = vsel %vm1274, %v1247, %v1249
        %v1301 = vsel %vm1274, %v1244, %v1246
        %v1302 = vsel %vm1274, %v1245, %v1247
        %v1303 = vsel %vm1274, %v1242, %v1244
        %v1304 = vsel %vm1274, %v1243, %v1245
        %v1305 = vsel %vm1274, %v1272, %v1242
        %v1306 = vsel %vm1274, %v1273, %v1243
        %v1307 = vmul.f32 %v1305, %v1226
        %v1308 = vmul.f32 %v1306, %v1226
        %v1309 = vmul.f32 %v1303, %v1227
        %v1310 = vmul.f32 %v1304, %v1227
        %v1311 = vmul.f32 %v1301, %v1228
        %v1312 = vmul.f32 %v1302, %v1228
        %v1313 = vmul.f32 %v1299, %v1229
        %v1314 = vmul.f32 %v1300, %v1229
        %v1315 = vmul.f32 %v1297, %v1230
        %v1316 = vmul.f32 %v1298, %v1230
        %v1317 = vmul.f32 %v1295, %v1231
        %v1318 = vmul.f32 %v1296, %v1231
        %v1319 = vmul.f32 %v1293, %v1232
        %v1320 = vmul.f32 %v1294, %v1232
        %v1321 = vmul.f32 %v1291, %v1233
        %v1322 = vmul.f32 %v1292, %v1233
        %v1323 = vmul.f32 %v1289, %v1234
        %v1324 = vmul.f32 %v1290, %v1234
        %v1325 = vmul.f32 %v1287, %v1235
        %v1326 = vmul.f32 %v1288, %v1235
        %v1327 = vmul.f32 %v1285, %v1236
        %v1328 = vmul.f32 %v1286, %v1236
        %v1329 = vmul.f32 %v1283, %v1237
        %v1330 = vmul.f32 %v1284, %v1237
        %v1331 = vmul.f32 %v1281, %v1238
        %v1332 = vmul.f32 %v1282, %v1238
        %v1333 = vmul.f32 %v1279, %v1239
        %v1334 = vmul.f32 %v1280, %v1239
        %v1335 = vmul.f32 %v1277, %v1240
        %v1336 = vmul.f32 %v1278, %v1240
        %v1337 = vmul.f32 %v1275, %v1241
        %v1338 = vmul.f32 %v1276, %v1241
        %v1339 = vsub.f32 1.0, %v1226
        %v1340 = vsub.f32 1.0, %v1227
        %v1341 = vsub.f32 1.0, %v1228
        %v1342 = vsub.f32 1.0, %v1229
        %v1343 = vsub.f32 1.0, %v1230
        %v1344 = vsub.f32 1.0, %v1231
        %v1345 = vsub.f32 1.0, %v1232
        %v1346 = vsub.f32 1.0, %v1233
        %v1347 = vsub.f32 1.0, %v1234
        %v1348 = vsub.f32 1.0, %v1235
        %v1349 = vsub.f32 1.0, %v1236
        %v1350 = vsub.f32 1.0, %v1237
        %v1351 = vsub.f32 1.0, %v1238
        %v1352 = vsub.f32 1.0, %v1239
        %v1353 = vsub.f32 1.0, %v1240
        %v1354 = vsub.f32 1.0, %v1241
        %v1355 = vadd.f32 %v1307, %v1339
        %v1356 = vadd.f32 %v1308, %v1339
        %v1357 = vadd.f32 %v1309, %v1340
        %v1358 = vadd.f32 %v1310, %v1340
        %v1359 = vadd.f32 %v1311, %v1341
        %v1360 = vadd.f32 %v1312, %v1341
        %v1361 = vadd.f32 %v1313, %v1342
        %v1362 = vadd.f32 %v1314, %v1342
        %v1363 = vadd.f32 %v1315, %v1343
        %v1364 = vadd.f32 %v1316, %v1343
        %v1365 = vadd.f32 %v1317, %v1344
        %v1366 = vadd.f32 %v1318, %v1344
        %v1367 = vadd.f32 %v1319, %v1345
        %v1368 = vadd.f32 %v1320, %v1345
        %v1369 = vadd.f32 %v1321, %v1346
        %v1370 = vadd.f32 %v1322, %v1346
        %v1371 = vadd.f32 %v1323, %v1347
        %v1372 = vadd.f32 %v1324, %v1347
        %v1373 = vadd.f32 %v1325, %v1348
        %v1374 = vadd.f32 %v1326, %v1348
        %v1375 = vadd.f32 %v1327, %v1349
        %v1376 = vadd.f32 %v1328, %v1349
        %v1377 = vadd.f32 %v1329, %v1350
        %v1378 = vadd.f32 %v1330, %v1350
        %v1379 = vadd.f32 %v1331, %v1351
        %v1380 = vadd.f32 %v1332, %v1351
        %v1381 = vadd.f32 %v1333, %v1352
        %v1382 = vadd.f32 %v1334, %v1352
        %v1383 = vadd.f32 %v1335, %v1353
        %v1384 = vadd.f32 %v1336, %v1353
        %v1385 = vadd.f32 %v1337, %v1354
        %v1386 = vadd.f32 %v1338, %v1354
        %v1387 = vmul.f32 %v1145, %v1355
        %v1388 = vmul.f32 %v1146, %v1356
        %v1389 = vmul.f32 %v1147, %v1357
        %v1390 = vmul.f32 %v1148, %v1358
        %v1391 = vmul.f32 %v1149, %v1359
        %v1392 = vmul.f32 %v1150, %v1360
        %v1393 = vmul.f32 %v1151, %v1361
        %v1394 = vmul.f32 %v1152, %v1362
        %v1395 = vmul.f32 %v1153, %v1363
        %v1396 = vmul.f32 %v1154, %v1364
        %v1397 = vmul.f32 %v1155, %v1365
        %v1398 = vmul.f32 %v1156, %v1366
        %v1399 = vmul.f32 %v1157, %v1367
        %v1400 = vmul.f32 %v1158, %v1368
        %v1401 = vmul.f32 %v1159, %v1369
        %v1402 = vmul.f32 %v1160, %v1370
        %v1403 = vmul.f32 %v1161, %v1371
        %v1404 = vmul.f32 %v1162, %v1372
        %v1405 = vmul.f32 %v1163, %v1373
        %v1406 = vmul.f32 %v1164, %v1374
        %v1407 = vmul.f32 %v1165, %v1375
        %v1408 = vmul.f32 %v1166, %v1376
        %v1409 = vmul.f32 %v1167, %v1377
        %v1410 = vmul.f32 %v1168, %v1378
        %v1411 = vmul.f32 %v1169, %v1379
        %v1412 = vmul.f32 %v1170, %v1380
        %v1413 = vmul.f32 %v1171, %v1381
        %v1414 = vmul.f32 %v1172, %v1382
        %v1415 = vmul.f32 %v1173, %v1383
        %v1416 = vmul.f32 %v1174, %v1384
        %v1417 = vmul.f32 %v1175, %v1385
        %v1418 = vmul.f32 %v1176, %v1386
        %vm1419 = vcmp.ge.s32.totalorder %v1178, 2
        %vm1420 = vcmp.ge.s32.totalorder %v1179, 2
        %vm1421 = vcmp.ge.s32.totalorder %v1180, 2
        %vm1422 = vcmp.ge.s32.totalorder %v1181, 2
        %vm1423 = vcmp.ge.s32.totalorder %v1182, 2
        %vm1424 = vcmp.ge.s32.totalorder %v1183, 2
        %vm1425 = vcmp.ge.s32.totalorder %v1184, 2
        %vm1426 = vcmp.ge.s32.totalorder %v1185, 2
        %vm1427 = vcmp.ge.s32.totalorder %v1186, 2
        %vm1428 = vcmp.ge.s32.totalorder %v1187, 2
        %vm1429 = vcmp.ge.s32.totalorder %v1188, 2
        %vm1430 = vcmp.ge.s32.totalorder %v1189, 2
        %vm1431 = vcmp.ge.s32.totalorder %v1190, 2
        %vm1432 = vcmp.ge.s32.totalorder %v1191, 2
        %vm1433 = vcmp.ge.s32.totalorder %v1192, 2
        %vm1434 = vcmp.ge.s32.totalorder %v1193, 2
        %v1435 = vsel %vm1419, 1, 0
        %v1436 = vsel %vm1420, 1, 0
        %v1437 = vsel %vm1421, 1, 0
        %v1438 = vsel %vm1422, 1, 0
        %v1439 = vsel %vm1423, 1, 0
        %v1440 = vsel %vm1424, 1, 0
        %v1441 = vsel %vm1425, 1, 0
        %v1442 = vsel %vm1426, 1, 0
        %v1443 = vsel %vm1427, 1, 0
        %v1444 = vsel %vm1428, 1, 0
        %v1445 = vsel %vm1429, 1, 0
        %v1446 = vsel %vm1430, 1, 0
        %v1447 = vsel %vm1431, 1, 0
        %v1448 = vsel %vm1432, 1, 0
        %v1449 = vsel %vm1433, 1, 0
        %v1450 = vsel %vm1434, 1, 0
        %v1451 = vcvt.s32.f32 %v1435
        %v1452 = vcvt.s32.f32 %v1436
        %v1453 = vcvt.s32.f32 %v1437
        %v1454 = vcvt.s32.f32 %v1438
        %v1455 = vcvt.s32.f32 %v1439
        %v1456 = vcvt.s32.f32 %v1440
        %v1457 = vcvt.s32.f32 %v1441
        %v1458 = vcvt.s32.f32 %v1442
        %v1459 = vcvt.s32.f32 %v1443
        %v1460 = vcvt.s32.f32 %v1444
        %v1461 = vcvt.s32.f32 %v1445
        %v1462 = vcvt.s32.f32 %v1446
        %v1463 = vcvt.s32.f32 %v1447
        %v1464 = vcvt.s32.f32 %v1448
        %v1465 = vcvt.s32.f32 %v1449
        %v1466 = vcvt.s32.f32 %v1450
        %v1467 = vrot.slane %v1387, 6
        %v1468 = vrot.slane %v1388, 6
        %v1469 = vrot.slane %v1389, 6
        %v1470 = vrot.slane %v1390, 6
        %v1471 = vrot.slane %v1391, 6
        %v1472 = vrot.slane %v1392, 6
        %v1473 = vrot.slane %v1393, 6
        %v1474 = vrot.slane %v1394, 6
        %v1475 = vrot.slane %v1395, 6
        %v1476 = vrot.slane %v1396, 6
        %v1477 = vrot.slane %v1397, 6
        %v1478 = vrot.slane %v1398, 6
        %v1479 = vrot.slane %v1399, 6
        %v1480 = vrot.slane %v1400, 6
        %v1481 = vrot.slane %v1401, 6
        %v1482 = vrot.slane %v1402, 6
        %v1483 = vrot.slane %v1403, 6
        %v1484 = vrot.slane %v1404, 6
        %v1485 = vrot.slane %v1405, 6
        %v1486 = vrot.slane %v1406, 6
        %v1487 = vrot.slane %v1407, 6
        %v1488 = vrot.slane %v1408, 6
        %v1489 = vrot.slane %v1409, 6
        %v1490 = vrot.slane %v1410, 6
        %v1491 = vrot.slane %v1411, 6
        %v1492 = vrot.slane %v1412, 6
        %v1493 = vrot.slane %v1413, 6
        %v1494 = vrot.slane %v1414, 6
        %v1495 = vrot.slane %v1415, 6
        %v1496 = vrot.slane %v1416, 6
        %v1497 = vrot.slane %v1417, 6
        %v1498 = vrot.slane %v1418, 6
        %vm1499 = vcmp.lt.s32.totalorder %v1178, 2
        %v1500 = vsel %vm1499, %v1495, %v1497
        %v1501 = vsel %vm1499, %v1496, %v1498
        %v1502 = vsel %vm1499, %v1493, %v1495
        %v1503 = vsel %vm1499, %v1494, %v1496
        %v1504 = vsel %vm1499, %v1491, %v1493
        %v1505 = vsel %vm1499, %v1492, %v1494
        %v1506 = vsel %vm1499, %v1489, %v1491
        %v1507 = vsel %vm1499, %v1490, %v1492
        %v1508 = vsel %vm1499, %v1487, %v1489
        %v1509 = vsel %vm1499, %v1488, %v1490
        %v1510 = vsel %vm1499, %v1485, %v1487
        %v1511 = vsel %vm1499, %v1486, %v1488
        %v1512 = vsel %vm1499, %v1483, %v1485
        %v1513 = vsel %vm1499, %v1484, %v1486
        %v1514 = vsel %vm1499, %v1481, %v1483
        %v1515 = vsel %vm1499, %v1482, %v1484
        %v1516 = vsel %vm1499, %v1479, %v1481
        %v1517 = vsel %vm1499, %v1480, %v1482
        %v1518 = vsel %vm1499, %v1477, %v1479
        %v1519 = vsel %vm1499, %v1478, %v1480
        %v1520 = vsel %vm1499, %v1475, %v1477
        %v1521 = vsel %vm1499, %v1476, %v1478
        %v1522 = vsel %vm1499, %v1473, %v1475
        %v1523 = vsel %vm1499, %v1474, %v1476
        %v1524 = vsel %vm1499, %v1471, %v1473
        %v1525 = vsel %vm1499, %v1472, %v1474
        %v1526 = vsel %vm1499, %v1469, %v1471
        %v1527 = vsel %vm1499, %v1470, %v1472
        %v1528 = vsel %vm1499, %v1467, %v1469
        %v1529 = vsel %vm1499, %v1468, %v1470
        %v1530 = vsel %vm1499, %v1497, %v1467
        %v1531 = vsel %vm1499, %v1498, %v1468
        %v1532 = vmul.f32 %v1530, %v1451
        %v1533 = vmul.f32 %v1531, %v1451
        %v1534 = vmul.f32 %v1528, %v1452
        %v1535 = vmul.f32 %v1529, %v1452
        %v1536 = vmul.f32 %v1526, %v1453
        %v1537 = vmul.f32 %v1527, %v1453
        %v1538 = vmul.f32 %v1524, %v1454
        %v1539 = vmul.f32 %v1525, %v1454
        %v1540 = vmul.f32 %v1522, %v1455
        %v1541 = vmul.f32 %v1523, %v1455
        %v1542 = vmul.f32 %v1520, %v1456
        %v1543 = vmul.f32 %v1521, %v1456
        %v1544 = vmul.f32 %v1518, %v1457
        %v1545 = vmul.f32 %v1519, %v1457
        %v1546 = vmul.f32 %v1516, %v1458
        %v1547 = vmul.f32 %v1517, %v1458
        %v1548 = vmul.f32 %v1514, %v1459
        %v1549 = vmul.f32 %v1515, %v1459
        %v1550 = vmul.f32 %v1512, %v1460
        %v1551 = vmul.f32 %v1513, %v1460
        %v1552 = vmul.f32 %v1510, %v1461
        %v1553 = vmul.f32 %v1511, %v1461
        %v1554 = vmul.f32 %v1508, %v1462
        %v1555 = vmul.f32 %v1509, %v1462
        %v1556 = vmul.f32 %v1506, %v1463
        %v1557 = vmul.f32 %v1507, %v1463
        %v1558 = vmul.f32 %v1504, %v1464
        %v1559 = vmul.f32 %v1505, %v1464
        %v1560 = vmul.f32 %v1502, %v1465
        %v1561 = vmul.f32 %v1503, %v1465
        %v1562 = vmul.f32 %v1500, %v1466
        %v1563 = vmul.f32 %v1501, %v1466
        %v1564 = vsub.f32 1.0, %v1451
        %v1565 = vsub.f32 1.0, %v1452
        %v1566 = vsub.f32 1.0, %v1453
        %v1567 = vsub.f32 1.0, %v1454
        %v1568 = vsub.f32 1.0, %v1455
        %v1569 = vsub.f32 1.0, %v1456
        %v1570 = vsub.f32 1.0, %v1457
        %v1571 = vsub.f32 1.0, %v1458
        %v1572 = vsub.f32 1.0, %v1459
        %v1573 = vsub.f32 1.0, %v1460
        %v1574 = vsub.f32 1.0, %v1461
        %v1575 = vsub.f32 1.0, %v1462
        %v1576 = vsub.f32 1.0, %v1463
        %v1577 = vsub.f32 1.0, %v1464
        %v1578 = vsub.f32 1.0, %v1465
        %v1579 = vsub.f32 1.0, %v1466
        %v1580 = vadd.f32 %v1532, %v1564
        %v1581 = vadd.f32 %v1533, %v1564
        %v1582 = vadd.f32 %v1534, %v1565
        %v1583 = vadd.f32 %v1535, %v1565
        %v1584 = vadd.f32 %v1536, %v1566
        %v1585 = vadd.f32 %v1537, %v1566
        %v1586 = vadd.f32 %v1538, %v1567
        %v1587 = vadd.f32 %v1539, %v1567
        %v1588 = vadd.f32 %v1540, %v1568
        %v1589 = vadd.f32 %v1541, %v1568
        %v1590 = vadd.f32 %v1542, %v1569
        %v1591 = vadd.f32 %v1543, %v1569
        %v1592 = vadd.f32 %v1544, %v1570
        %v1593 = vadd.f32 %v1545, %v1570
        %v1594 = vadd.f32 %v1546, %v1571
        %v1595 = vadd.f32 %v1547, %v1571
        %v1596 = vadd.f32 %v1548, %v1572
        %v1597 = vadd.f32 %v1549, %v1572
        %v1598 = vadd.f32 %v1550, %v1573
        %v1599 = vadd.f32 %v1551, %v1573
        %v1600 = vadd.f32 %v1552, %v1574
        %v1601 = vadd.f32 %v1553, %v1574
        %v1602 = vadd.f32 %v1554, %v1575
        %v1603 = vadd.f32 %v1555, %v1575
        %v1604 = vadd.f32 %v1556, %v1576
        %v1605 = vadd.f32 %v1557, %v1576
        %v1606 = vadd.f32 %v1558, %v1577
        %v1607 = vadd.f32 %v1559, %v1577
        %v1608 = vadd.f32 %v1560, %v1578
        %v1609 = vadd.f32 %v1561, %v1578
        %v1610 = vadd.f32 %v1562, %v1579
        %v1611 = vadd.f32 %v1563, %v1579
        %v1612 = vmul.f32 %v1387, %v1580
        %v1613 = vmul.f32 %v1388, %v1581
        %v1614 = vmul.f32 %v1389, %v1582
        %v1615 = vmul.f32 %v1390, %v1583
        %v1616 = vmul.f32 %v1391, %v1584
        %v1617 = vmul.f32 %v1392, %v1585
        %v1618 = vmul.f32 %v1393, %v1586
        %v1619 = vmul.f32 %v1394, %v1587
        %v1620 = vmul.f32 %v1395, %v1588
        %v1621 = vmul.f32 %v1396, %v1589
        %v1622 = vmul.f32 %v1397, %v1590
        %v1623 = vmul.f32 %v1398, %v1591
        %v1624 = vmul.f32 %v1399, %v1592
        %v1625 = vmul.f32 %v1400, %v1593
        %v1626 = vmul.f32 %v1401, %v1594
        %v1627 = vmul.f32 %v1402, %v1595
        %v1628 = vmul.f32 %v1403, %v1596
        %v1629 = vmul.f32 %v1404, %v1597
        %v1630 = vmul.f32 %v1405, %v1598
        %v1631 = vmul.f32 %v1406, %v1599
        %v1632 = vmul.f32 %v1407, %v1600
        %v1633 = vmul.f32 %v1408, %v1601
        %v1634 = vmul.f32 %v1409, %v1602
        %v1635 = vmul.f32 %v1410, %v1603
        %v1636 = vmul.f32 %v1411, %v1604
        %v1637 = vmul.f32 %v1412, %v1605
        %v1638 = vmul.f32 %v1413, %v1606
        %v1639 = vmul.f32 %v1414, %v1607
        %v1640 = vmul.f32 %v1415, %v1608
        %v1641 = vmul.f32 %v1416, %v1609
        %v1642 = vmul.f32 %v1417, %v1610
        %v1643 = vmul.f32 %v1418, %v1611
        %vm1644 = vcmp.ge.s32.totalorder %v1178, 4
        %vm1645 = vcmp.ge.s32.totalorder %v1179, 4
        %vm1646 = vcmp.ge.s32.totalorder %v1180, 4
        %vm1647 = vcmp.ge.s32.totalorder %v1181, 4
        %vm1648 = vcmp.ge.s32.totalorder %v1182, 4
        %vm1649 = vcmp.ge.s32.totalorder %v1183, 4
        %vm1650 = vcmp.ge.s32.totalorder %v1184, 4
        %vm1651 = vcmp.ge.s32.totalorder %v1185, 4
        %vm1652 = vcmp.ge.s32.totalorder %v1186, 4
        %vm1653 = vcmp.ge.s32.totalorder %v1187, 4
        %vm1654 = vcmp.ge.s32.totalorder %v1188, 4
        %vm1655 = vcmp.ge.s32.totalorder %v1189, 4
        %vm1656 = vcmp.ge.s32.totalorder %v1190, 4
        %vm1657 = vcmp.ge.s32.totalorder %v1191, 4
        %vm1658 = vcmp.ge.s32.totalorder %v1192, 4
        %vm1659 = vcmp.ge.s32.totalorder %v1193, 4
        %v1660 = vsel %vm1644, 1, 0
        %v1661 = vsel %vm1645, 1, 0
        %v1662 = vsel %vm1646, 1, 0
        %v1663 = vsel %vm1647, 1, 0
        %v1664 = vsel %vm1648, 1, 0
        %v1665 = vsel %vm1649, 1, 0
        %v1666 = vsel %vm1650, 1, 0
        %v1667 = vsel %vm1651, 1, 0
        %v1668 = vsel %vm1652, 1, 0
        %v1669 = vsel %vm1653, 1, 0
        %v1670 = vsel %vm1654, 1, 0
        %v1671 = vsel %vm1655, 1, 0
        %v1672 = vsel %vm1656, 1, 0
        %v1673 = vsel %vm1657, 1, 0
        %v1674 = vsel %vm1658, 1, 0
        %v1675 = vsel %vm1659, 1, 0
        %v1676 = vcvt.s32.f32 %v1660
        %v1677 = vcvt.s32.f32 %v1661
        %v1678 = vcvt.s32.f32 %v1662
        %v1679 = vcvt.s32.f32 %v1663
        %v1680 = vcvt.s32.f32 %v1664
        %v1681 = vcvt.s32.f32 %v1665
        %v1682 = vcvt.s32.f32 %v1666
        %v1683 = vcvt.s32.f32 %v1667
        %v1684 = vcvt.s32.f32 %v1668
        %v1685 = vcvt.s32.f32 %v1669
        %v1686 = vcvt.s32.f32 %v1670
        %v1687 = vcvt.s32.f32 %v1671
        %v1688 = vcvt.s32.f32 %v1672
        %v1689 = vcvt.s32.f32 %v1673
        %v1690 = vcvt.s32.f32 %v1674
        %v1691 = vcvt.s32.f32 %v1675
        %v1692 = vrot.slane %v1612, 4
        %v1693 = vrot.slane %v1613, 4
        %v1694 = vrot.slane %v1614, 4
        %v1695 = vrot.slane %v1615, 4
        %v1696 = vrot.slane %v1616, 4
        %v1697 = vrot.slane %v1617, 4
        %v1698 = vrot.slane %v1618, 4
        %v1699 = vrot.slane %v1619, 4
        %v1700 = vrot.slane %v1620, 4
        %v1701 = vrot.slane %v1621, 4
        %v1702 = vrot.slane %v1622, 4
        %v1703 = vrot.slane %v1623, 4
        %v1704 = vrot.slane %v1624, 4
        %v1705 = vrot.slane %v1625, 4
        %v1706 = vrot.slane %v1626, 4
        %v1707 = vrot.slane %v1627, 4
        %v1708 = vrot.slane %v1628, 4
        %v1709 = vrot.slane %v1629, 4
        %v1710 = vrot.slane %v1630, 4
        %v1711 = vrot.slane %v1631, 4
        %v1712 = vrot.slane %v1632, 4
        %v1713 = vrot.slane %v1633, 4
        %v1714 = vrot.slane %v1634, 4
        %v1715 = vrot.slane %v1635, 4
        %v1716 = vrot.slane %v1636, 4
        %v1717 = vrot.slane %v1637, 4
        %v1718 = vrot.slane %v1638, 4
        %v1719 = vrot.slane %v1639, 4
        %v1720 = vrot.slane %v1640, 4
        %v1721 = vrot.slane %v1641, 4
        %v1722 = vrot.slane %v1642, 4
        %v1723 = vrot.slane %v1643, 4
        %vm1724 = vcmp.lt.s32.totalorder %v1178, 4
        %v1725 = vsel %vm1724, %v1720, %v1722
        %v1726 = vsel %vm1724, %v1721, %v1723
        %v1727 = vsel %vm1724, %v1718, %v1720
        %v1728 = vsel %vm1724, %v1719, %v1721
        %v1729 = vsel %vm1724, %v1716, %v1718
        %v1730 = vsel %vm1724, %v1717, %v1719
        %v1731 = vsel %vm1724, %v1714, %v1716
        %v1732 = vsel %vm1724, %v1715, %v1717
        %v1733 = vsel %vm1724, %v1712, %v1714
        %v1734 = vsel %vm1724, %v1713, %v1715
        %v1735 = vsel %vm1724, %v1710, %v1712
        %v1736 = vsel %vm1724, %v1711, %v1713
        %v1737 = vsel %vm1724, %v1708, %v1710
        %v1738 = vsel %vm1724, %v1709, %v1711
        %v1739 = vsel %vm1724, %v1706, %v1708
        %v1740 = vsel %vm1724, %v1707, %v1709
        %v1741 = vsel %vm1724, %v1704, %v1706
        %v1742 = vsel %vm1724, %v1705, %v1707
        %v1743 = vsel %vm1724, %v1702, %v1704
        %v1744 = vsel %vm1724, %v1703, %v1705
        %v1745 = vsel %vm1724, %v1700, %v1702
        %v1746 = vsel %vm1724, %v1701, %v1703
        %v1747 = vsel %vm1724, %v1698, %v1700
        %v1748 = vsel %vm1724, %v1699, %v1701
        %v1749 = vsel %vm1724, %v1696, %v1698
        %v1750 = vsel %vm1724, %v1697, %v1699
        %v1751 = vsel %vm1724, %v1694, %v1696
        %v1752 = vsel %vm1724, %v1695, %v1697
        %v1753 = vsel %vm1724, %v1692, %v1694
        %v1754 = vsel %vm1724, %v1693, %v1695
        %v1755 = vsel %vm1724, %v1722, %v1692
        %v1756 = vsel %vm1724, %v1723, %v1693
        %v1757 = vmul.f32 %v1755, %v1676
        %v1758 = vmul.f32 %v1756, %v1676
        %v1759 = vmul.f32 %v1753, %v1677
        %v1760 = vmul.f32 %v1754, %v1677
        %v1761 = vmul.f32 %v1751, %v1678
        %v1762 = vmul.f32 %v1752, %v1678
        %v1763 = vmul.f32 %v1749, %v1679
        %v1764 = vmul.f32 %v1750, %v1679
        %v1765 = vmul.f32 %v1747, %v1680
        %v1766 = vmul.f32 %v1748, %v1680
        %v1767 = vmul.f32 %v1745, %v1681
        %v1768 = vmul.f32 %v1746, %v1681
        %v1769 = vmul.f32 %v1743, %v1682
        %v1770 = vmul.f32 %v1744, %v1682
        %v1771 = vmul.f32 %v1741, %v1683
        %v1772 = vmul.f32 %v1742, %v1683
        %v1773 = vmul.f32 %v1739, %v1684
        %v1774 = vmul.f32 %v1740, %v1684
        %v1775 = vmul.f32 %v1737, %v1685
        %v1776 = vmul.f32 %v1738, %v1685
        %v1777 = vmul.f32 %v1735, %v1686
        %v1778 = vmul.f32 %v1736, %v1686
        %v1779 = vmul.f32 %v1733, %v1687
        %v1780 = vmul.f32 %v1734, %v1687
        %v1781 = vmul.f32 %v1731, %v1688
        %v1782 = vmul.f32 %v1732, %v1688
        %v1783 = vmul.f32 %v1729, %v1689
        %v1784 = vmul.f32 %v1730, %v1689
        %v1785 = vmul.f32 %v1727, %v1690
        %v1786 = vmul.f32 %v1728, %v1690
        %v1787 = vmul.f32 %v1725, %v1691
        %v1788 = vmul.f32 %v1726, %v1691
        %v1789 = vsub.f32 1.0, %v1676
        %v1790 = vsub.f32 1.0, %v1677
        %v1791 = vsub.f32 1.0, %v1678
        %v1792 = vsub.f32 1.0, %v1679
        %v1793 = vsub.f32 1.0, %v1680
        %v1794 = vsub.f32 1.0, %v1681
        %v1795 = vsub.f32 1.0, %v1682
        %v1796 = vsub.f32 1.0, %v1683
        %v1797 = vsub.f32 1.0, %v1684
        %v1798 = vsub.f32 1.0, %v1685
        %v1799 = vsub.f32 1.0, %v1686
        %v1800 = vsub.f32 1.0, %v1687
        %v1801 = vsub.f32 1.0, %v1688
        %v1802 = vsub.f32 1.0, %v1689
        %v1803 = vsub.f32 1.0, %v1690
        %v1804 = vsub.f32 1.0, %v1691
        %v1805 = vadd.f32 %v1757, %v1789
        %v1806 = vadd.f32 %v1758, %v1789
        %v1807 = vadd.f32 %v1759, %v1790
        %v1808 = vadd.f32 %v1760, %v1790
        %v1809 = vadd.f32 %v1761, %v1791
        %v1810 = vadd.f32 %v1762, %v1791
        %v1811 = vadd.f32 %v1763, %v1792
        %v1812 = vadd.f32 %v1764, %v1792
        %v1813 = vadd.f32 %v1765, %v1793
        %v1814 = vadd.f32 %v1766, %v1793
        %v1815 = vadd.f32 %v1767, %v1794
        %v1816 = vadd.f32 %v1768, %v1794
        %v1817 = vadd.f32 %v1769, %v1795
        %v1818 = vadd.f32 %v1770, %v1795
        %v1819 = vadd.f32 %v1771, %v1796
        %v1820 = vadd.f32 %v1772, %v1796
        %v1821 = vadd.f32 %v1773, %v1797
        %v1822 = vadd.f32 %v1774, %v1797
        %v1823 = vadd.f32 %v1775, %v1798
        %v1824 = vadd.f32 %v1776, %v1798
        %v1825 = vadd.f32 %v1777, %v1799
        %v1826 = vadd.f32 %v1778, %v1799
        %v1827 = vadd.f32 %v1779, %v1800
        %v1828 = vadd.f32 %v1780, %v1800
        %v1829 = vadd.f32 %v1781, %v1801
        %v1830 = vadd.f32 %v1782, %v1801
        %v1831 = vadd.f32 %v1783, %v1802
        %v1832 = vadd.f32 %v1784, %v1802
        %v1833 = vadd.f32 %v1785, %v1803
        %v1834 = vadd.f32 %v1786, %v1803
        %v1835 = vadd.f32 %v1787, %v1804
        %v1836 = vadd.f32 %v1788, %v1804
        %v1837 = vmul.f32 %v1612, %v1805
        %v1838 = vmul.f32 %v1613, %v1806
        %v1839 = vmul.f32 %v1614, %v1807
        %v1840 = vmul.f32 %v1615, %v1808
        %v1841 = vmul.f32 %v1616, %v1809
        %v1842 = vmul.f32 %v1617, %v1810
        %v1843 = vmul.f32 %v1618, %v1811
        %v1844 = vmul.f32 %v1619, %v1812
        %v1845 = vmul.f32 %v1620, %v1813
        %v1846 = vmul.f32 %v1621, %v1814
        %v1847 = vmul.f32 %v1622, %v1815
        %v1848 = vmul.f32 %v1623, %v1816
        %v1849 = vmul.f32 %v1624, %v1817
        %v1850 = vmul.f32 %v1625, %v1818
        %v1851 = vmul.f32 %v1626, %v1819
        %v1852 = vmul.f32 %v1627, %v1820
        %v1853 = vmul.f32 %v1628, %v1821
        %v1854 = vmul.f32 %v1629, %v1822
        %v1855 = vmul.f32 %v1630, %v1823
        %v1856 = vmul.f32 %v1631, %v1824
        %v1857 = vmul.f32 %v1632, %v1825
        %v1858 = vmul.f32 %v1633, %v1826
        %v1859 = vmul.f32 %v1634, %v1827
        %v1860 = vmul.f32 %v1635, %v1828
        %v1861 = vmul.f32 %v1636, %v1829
        %v1862 = vmul.f32 %v1637, %v1830
        %v1863 = vmul.f32 %v1638, %v1831
        %v1864 = vmul.f32 %v1639, %v1832
        %v1865 = vmul.f32 %v1640, %v1833
        %v1866 = vmul.f32 %v1641, %v1834
        %v1867 = vmul.f32 %v1642, %v1835
        %v1868 = vmul.f32 %v1643, %v1836
        %vm1869 = vcmp.ge.s32.totalorder %v1178, 8
        %vm1870 = vcmp.ge.s32.totalorder %v1179, 8
        %vm1871 = vcmp.ge.s32.totalorder %v1180, 8
        %vm1872 = vcmp.ge.s32.totalorder %v1181, 8
        %vm1873 = vcmp.ge.s32.totalorder %v1182, 8
        %vm1874 = vcmp.ge.s32.totalorder %v1183, 8
        %vm1875 = vcmp.ge.s32.totalorder %v1184, 8
        %vm1876 = vcmp.ge.s32.totalorder %v1185, 8
        %vm1877 = vcmp.ge.s32.totalorder %v1186, 8
        %vm1878 = vcmp.ge.s32.totalorder %v1187, 8
        %vm1879 = vcmp.ge.s32.totalorder %v1188, 8
        %vm1880 = vcmp.ge.s32.totalorder %v1189, 8
        %vm1881 = vcmp.ge.s32.totalorder %v1190, 8
        %vm1882 = vcmp.ge.s32.totalorder %v1191, 8
        %vm1883 = vcmp.ge.s32.totalorder %v1192, 8
        %vm1884 = vcmp.ge.s32.totalorder %v1193, 8
        %v1885 = vsel %vm1869, 1, 0
        %v1886 = vsel %vm1870, 1, 0
        %v1887 = vsel %vm1871, 1, 0
        %v1888 = vsel %vm1872, 1, 0
        %v1889 = vsel %vm1873, 1, 0
        %v1890 = vsel %vm1874, 1, 0
        %v1891 = vsel %vm1875, 1, 0
        %v1892 = vsel %vm1876, 1, 0
        %v1893 = vsel %vm1877, 1, 0
        %v1894 = vsel %vm1878, 1, 0
        %v1895 = vsel %vm1879, 1, 0
        %v1896 = vsel %vm1880, 1, 0
        %v1897 = vsel %vm1881, 1, 0
        %v1898 = vsel %vm1882, 1, 0
        %v1899 = vsel %vm1883, 1, 0
        %v1900 = vsel %vm1884, 1, 0
        %v1901 = vcvt.s32.f32 %v1885
        %v1902 = vcvt.s32.f32 %v1886
        %v1903 = vcvt.s32.f32 %v1887
        %v1904 = vcvt.s32.f32 %v1888
        %v1905 = vcvt.s32.f32 %v1889
        %v1906 = vcvt.s32.f32 %v1890
        %v1907 = vcvt.s32.f32 %v1891
        %v1908 = vcvt.s32.f32 %v1892
        %v1909 = vcvt.s32.f32 %v1893
        %v1910 = vcvt.s32.f32 %v1894
        %v1911 = vcvt.s32.f32 %v1895
        %v1912 = vcvt.s32.f32 %v1896
        %v1913 = vcvt.s32.f32 %v1897
        %v1914 = vcvt.s32.f32 %v1898
        %v1915 = vcvt.s32.f32 %v1899
        %v1916 = vcvt.s32.f32 %v1900
        %v1917 = vmul.f32 %v1867, %v1901
        %v1918 = vmul.f32 %v1868, %v1901
        %v1919 = vmul.f32 %v1837, %v1902
        %v1920 = vmul.f32 %v1838, %v1902
        %v1921 = vmul.f32 %v1839, %v1903
        %v1922 = vmul.f32 %v1840, %v1903
        %v1923 = vmul.f32 %v1841, %v1904
        %v1924 = vmul.f32 %v1842, %v1904
        %v1925 = vmul.f32 %v1843, %v1905
        %v1926 = vmul.f32 %v1844, %v1905
        %v1927 = vmul.f32 %v1845, %v1906
        %v1928 = vmul.f32 %v1846, %v1906
        %v1929 = vmul.f32 %v1847, %v1907
        %v1930 = vmul.f32 %v1848, %v1907
        %v1931 = vmul.f32 %v1849, %v1908
        %v1932 = vmul.f32 %v1850, %v1908
        %v1933 = vmul.f32 %v1851, %v1909
        %v1934 = vmul.f32 %v1852, %v1909
        %v1935 = vmul.f32 %v1853, %v1910
        %v1936 = vmul.f32 %v1854, %v1910
        %v1937 = vmul.f32 %v1855, %v1911
        %v1938 = vmul.f32 %v1856, %v1911
        %v1939 = vmul.f32 %v1857, %v1912
        %v1940 = vmul.f32 %v1858, %v1912
        %v1941 = vmul.f32 %v1859, %v1913
        %v1942 = vmul.f32 %v1860, %v1913
        %v1943 = vmul.f32 %v1861, %v1914
        %v1944 = vmul.f32 %v1862, %v1914
        %v1945 = vmul.f32 %v1863, %v1915
        %v1946 = vmul.f32 %v1864, %v1915
        %v1947 = vmul.f32 %v1865, %v1916
        %v1948 = vmul.f32 %v1866, %v1916
        %v1949 = vsub.f32 1.0, %v1901
        %v1950 = vsub.f32 1.0, %v1902
        %v1951 = vsub.f32 1.0, %v1903
        %v1952 = vsub.f32 1.0, %v1904
        %v1953 = vsub.f32 1.0, %v1905
        %v1954 = vsub.f32 1.0, %v1906
        %v1955 = vsub.f32 1.0, %v1907
        %v1956 = vsub.f32 1.0, %v1908
        %v1957 = vsub.f32 1.0, %v1909
        %v1958 = vsub.f32 1.0, %v1910
        %v1959 = vsub.f32 1.0, %v1911
        %v1960 = vsub.f32 1.0, %v1912
        %v1961 = vsub.f32 1.0, %v1913
        %v1962 = vsub.f32 1.0, %v1914
        %v1963 = vsub.f32 1.0, %v1915
        %v1964 = vsub.f32 1.0, %v1916
        %v1965 = vadd.f32 %v1917, %v1949
        %v1966 = vadd.f32 %v1918, %v1949
        %v1967 = vadd.f32 %v1919, %v1950
        %v1968 = vadd.f32 %v1920, %v1950
        %v1969 = vadd.f32 %v1921, %v1951
        %v1970 = vadd.f32 %v1922, %v1951
        %v1971 = vadd.f32 %v1923, %v1952
        %v1972 = vadd.f32 %v1924, %v1952
        %v1973 = vadd.f32 %v1925, %v1953
        %v1974 = vadd.f32 %v1926, %v1953
        %v1975 = vadd.f32 %v1927, %v1954
        %v1976 = vadd.f32 %v1928, %v1954
        %v1977 = vadd.f32 %v1929, %v1955
        %v1978 = vadd.f32 %v1930, %v1955
        %v1979 = vadd.f32 %v1931, %v1956
        %v1980 = vadd.f32 %v1932, %v1956
        %v1981 = vadd.f32 %v1933, %v1957
        %v1982 = vadd.f32 %v1934, %v1957
        %v1983 = vadd.f32 %v1935, %v1958
        %v1984 = vadd.f32 %v1936, %v1958
        %v1985 = vadd.f32 %v1937, %v1959
        %v1986 = vadd.f32 %v1938, %v1959
        %v1987 = vadd.f32 %v1939, %v1960
        %v1988 = vadd.f32 %v1940, %v1960
        %v1989 = vadd.f32 %v1941, %v1961
        %v1990 = vadd.f32 %v1942, %v1961
        %v1991 = vadd.f32 %v1943, %v1962
        %v1992 = vadd.f32 %v1944, %v1962
        %v1993 = vadd.f32 %v1945, %v1963
        %v1994 = vadd.f32 %v1946, %v1963
        %v1995 = vadd.f32 %v1947, %v1964
        %v1996 = vadd.f32 %v1948, %v1964
        %v1997 = vmul.f32 %v1837, %v1965
        %v1998 = vmul.f32 %v1838, %v1966
        %v1999 = vmul.f32 %v1839, %v1967
        %v2000 = vmul.f32 %v1840, %v1968
        %v2001 = vmul.f32 %v1841, %v1969
        %v2002 = vmul.f32 %v1842, %v1970
        %v2003 = vmul.f32 %v1843, %v1971
        %v2004 = vmul.f32 %v1844, %v1972
        %v2005 = vmul.f32 %v1845, %v1973
        %v2006 = vmul.f32 %v1846, %v1974
        %v2007 = vmul.f32 %v1847, %v1975
        %v2008 = vmul.f32 %v1848, %v1976
        %v2009 = vmul.f32 %v1849, %v1977
        %v2010 = vmul.f32 %v1850, %v1978
        %v2011 = vmul.f32 %v1851, %v1979
        %v2012 = vmul.f32 %v1852, %v1980
        %v2013 = vmul.f32 %v1853, %v1981
        %v2014 = vmul.f32 %v1854, %v1982
        %v2015 = vmul.f32 %v1855, %v1983
        %v2016 = vmul.f32 %v1856, %v1984
        %v2017 = vmul.f32 %v1857, %v1985
        %v2018 = vmul.f32 %v1858, %v1986
        %v2019 = vmul.f32 %v1859, %v1987
        %v2020 = vmul.f32 %v1860, %v1988
        %v2021 = vmul.f32 %v1861, %v1989
        %v2022 = vmul.f32 %v1862, %v1990
        %v2023 = vmul.f32 %v1863, %v1991
        %v2024 = vmul.f32 %v1864, %v1992
        %v2025 = vmul.f32 %v1865, %v1993
        %v2026 = vmul.f32 %v1866, %v1994
        %v2027 = vmul.f32 %v1867, %v1995
        %v2028 = vmul.f32 %v1868, %v1996
        %vm2029 = vcmp.ge.s32.totalorder %v1178, 16
        %vm2030 = vcmp.ge.s32.totalorder %v1179, 16
        %vm2031 = vcmp.ge.s32.totalorder %v1180, 16
        %vm2032 = vcmp.ge.s32.totalorder %v1181, 16
        %vm2033 = vcmp.ge.s32.totalorder %v1182, 16
        %vm2034 = vcmp.ge.s32.totalorder %v1183, 16
        %vm2035 = vcmp.ge.s32.totalorder %v1184, 16
        %vm2036 = vcmp.ge.s32.totalorder %v1185, 16
        %vm2037 = vcmp.ge.s32.totalorder %v1186, 16
        %vm2038 = vcmp.ge.s32.totalorder %v1187, 16
        %vm2039 = vcmp.ge.s32.totalorder %v1188, 16
        %vm2040 = vcmp.ge.s32.totalorder %v1189, 16
        %vm2041 = vcmp.ge.s32.totalorder %v1190, 16
        %vm2042 = vcmp.ge.s32.totalorder %v1191, 16
        %vm2043 = vcmp.ge.s32.totalorder %v1192, 16
        %vm2044 = vcmp.ge.s32.totalorder %v1193, 16
        %v2045 = vsel %vm2029, 1, 0
        %v2046 = vsel %vm2030, 1, 0
        %v2047 = vsel %vm2031, 1, 0
        %v2048 = vsel %vm2032, 1, 0
        %v2049 = vsel %vm2033, 1, 0
        %v2050 = vsel %vm2034, 1, 0
        %v2051 = vsel %vm2035, 1, 0
        %v2052 = vsel %vm2036, 1, 0
        %v2053 = vsel %vm2037, 1, 0
        %v2054 = vsel %vm2038, 1, 0
        %v2055 = vsel %vm2039, 1, 0
        %v2056 = vsel %vm2040, 1, 0
        %v2057 = vsel %vm2041, 1, 0
        %v2058 = vsel %vm2042, 1, 0
        %v2059 = vsel %vm2043, 1, 0
        %v2060 = vsel %vm2044, 1, 0
        %v2061 = vcvt.s32.f32 %v2045
        %v2062 = vcvt.s32.f32 %v2046
        %v2063 = vcvt.s32.f32 %v2047
        %v2064 = vcvt.s32.f32 %v2048
        %v2065 = vcvt.s32.f32 %v2049
        %v2066 = vcvt.s32.f32 %v2050
        %v2067 = vcvt.s32.f32 %v2051
        %v2068 = vcvt.s32.f32 %v2052
        %v2069 = vcvt.s32.f32 %v2053
        %v2070 = vcvt.s32.f32 %v2054
        %v2071 = vcvt.s32.f32 %v2055
        %v2072 = vcvt.s32.f32 %v2056
        %v2073 = vcvt.s32.f32 %v2057
        %v2074 = vcvt.s32.f32 %v2058
        %v2075 = vcvt.s32.f32 %v2059
        %v2076 = vcvt.s32.f32 %v2060
        %v2077 = vmul.f32 %v2025, %v2061
        %v2078 = vmul.f32 %v2026, %v2061
        %v2079 = vmul.f32 %v2027, %v2062
        %v2080 = vmul.f32 %v2028, %v2062
        %v2081 = vmul.f32 %v1997, %v2063
        %v2082 = vmul.f32 %v1998, %v2063
        %v2083 = vmul.f32 %v1999, %v2064
        %v2084 = vmul.f32 %v2000, %v2064
        %v2085 = vmul.f32 %v2001, %v2065
        %v2086 = vmul.f32 %v2002, %v2065
        %v2087 = vmul.f32 %v2003, %v2066
        %v2088 = vmul.f32 %v2004, %v2066
        %v2089 = vmul.f32 %v2005, %v2067
        %v2090 = vmul.f32 %v2006, %v2067
        %v2091 = vmul.f32 %v2007, %v2068
        %v2092 = vmul.f32 %v2008, %v2068
        %v2093 = vmul.f32 %v2009, %v2069
        %v2094 = vmul.f32 %v2010, %v2069
        %v2095 = vmul.f32 %v2011, %v2070
        %v2096 = vmul.f32 %v2012, %v2070
        %v2097 = vmul.f32 %v2013, %v2071
        %v2098 = vmul.f32 %v2014, %v2071
        %v2099 = vmul.f32 %v2015, %v2072
        %v2100 = vmul.f32 %v2016, %v2072
        %v2101 = vmul.f32 %v2017, %v2073
        %v2102 = vmul.f32 %v2018, %v2073
        %v2103 = vmul.f32 %v2019, %v2074
        %v2104 = vmul.f32 %v2020, %v2074
        %v2105 = vmul.f32 %v2021, %v2075
        %v2106 = vmul.f32 %v2022, %v2075
        %v2107 = vmul.f32 %v2023, %v2076
        %v2108 = vmul.f32 %v2024, %v2076
        %v2109 = vsub.f32 1.0, %v2061
        %v2110 = vsub.f32 1.0, %v2062
        %v2111 = vsub.f32 1.0, %v2063
        %v2112 = vsub.f32 1.0, %v2064
        %v2113 = vsub.f32 1.0, %v2065
        %v2114 = vsub.f32 1.0, %v2066
        %v2115 = vsub.f32 1.0, %v2067
        %v2116 = vsub.f32 1.0, %v2068
        %v2117 = vsub.f32 1.0, %v2069
        %v2118 = vsub.f32 1.0, %v2070
        %v2119 = vsub.f32 1.0, %v2071
        %v2120 = vsub.f32 1.0, %v2072
        %v2121 = vsub.f32 1.0, %v2073
        %v2122 = vsub.f32 1.0, %v2074
        %v2123 = vsub.f32 1.0, %v2075
        %v2124 = vsub.f32 1.0, %v2076
        %v2125 = vadd.f32 %v2077, %v2109
        %v2126 = vadd.f32 %v2078, %v2109
        %v2127 = vadd.f32 %v2079, %v2110
        %v2128 = vadd.f32 %v2080, %v2110
        %v2129 = vadd.f32 %v2081, %v2111
        %v2130 = vadd.f32 %v2082, %v2111
        %v2131 = vadd.f32 %v2083, %v2112
        %v2132 = vadd.f32 %v2084, %v2112
        %v2133 = vadd.f32 %v2085, %v2113
        %v2134 = vadd.f32 %v2086, %v2113
        %v2135 = vadd.f32 %v2087, %v2114
        %v2136 = vadd.f32 %v2088, %v2114
        %v2137 = vadd.f32 %v2089, %v2115
        %v2138 = vadd.f32 %v2090, %v2115
        %v2139 = vadd.f32 %v2091, %v2116
        %v2140 = vadd.f32 %v2092, %v2116
        %v2141 = vadd.f32 %v2093, %v2117
        %v2142 = vadd.f32 %v2094, %v2117
        %v2143 = vadd.f32 %v2095, %v2118
        %v2144 = vadd.f32 %v2096, %v2118
        %v2145 = vadd.f32 %v2097, %v2119
        %v2146 = vadd.f32 %v2098, %v2119
        %v2147 = vadd.f32 %v2099, %v2120
        %v2148 = vadd.f32 %v2100, %v2120
        %v2149 = vadd.f32 %v2101, %v2121
        %v2150 = vadd.f32 %v2102, %v2121
        %v2151 = vadd.f32 %v2103, %v2122
        %v2152 = vadd.f32 %v2104, %v2122
        %v2153 = vadd.f32 %v2105, %v2123
        %v2154 = vadd.f32 %v2106, %v2123
        %v2155 = vadd.f32 %v2107, %v2124
        %v2156 = vadd.f32 %v2108, %v2124
        %v2157 = vmul.f32 %v1997, %v2125
        %v2158 = vmul.f32 %v1998, %v2126
        %v2159 = vmul.f32 %v1999, %v2127
        %v2160 = vmul.f32 %v2000, %v2128
        %v2161 = vmul.f32 %v2001, %v2129
        %v2162 = vmul.f32 %v2002, %v2130
        %v2163 = vmul.f32 %v2003, %v2131
        %v2164 = vmul.f32 %v2004, %v2132
        %v2165 = vmul.f32 %v2005, %v2133
        %v2166 = vmul.f32 %v2006, %v2134
        %v2167 = vmul.f32 %v2007, %v2135
        %v2168 = vmul.f32 %v2008, %v2136
        %v2169 = vmul.f32 %v2009, %v2137
        %v2170 = vmul.f32 %v2010, %v2138
        %v2171 = vmul.f32 %v2011, %v2139
        %v2172 = vmul.f32 %v2012, %v2140
        %v2173 = vmul.f32 %v2013, %v2141
        %v2174 = vmul.f32 %v2014, %v2142
        %v2175 = vmul.f32 %v2015, %v2143
        %v2176 = vmul.f32 %v2016, %v2144
        %v2177 = vmul.f32 %v2017, %v2145
        %v2178 = vmul.f32 %v2018, %v2146
        %v2179 = vmul.f32 %v2019, %v2147
        %v2180 = vmul.f32 %v2020, %v2148
        %v2181 = vmul.f32 %v2021, %v2149
        %v2182 = vmul.f32 %v2022, %v2150
        %v2183 = vmul.f32 %v2023, %v2151
        %v2184 = vmul.f32 %v2024, %v2152
        %v2185 = vmul.f32 %v2025, %v2153
        %v2186 = vmul.f32 %v2026, %v2154
        %v2187 = vmul.f32 %v2027, %v2155
        %v2188 = vmul.f32 %v2028, %v2156
        %vm2189 = vcmp.ge.s32.totalorder %v1178, 32
        %vm2190 = vcmp.ge.s32.totalorder %v1179, 32
        %vm2191 = vcmp.ge.s32.totalorder %v1180, 32
        %vm2192 = vcmp.ge.s32.totalorder %v1181, 32
        %vm2193 = vcmp.ge.s32.totalorder %v1182, 32
        %vm2194 = vcmp.ge.s32.totalorder %v1183, 32
        %vm2195 = vcmp.ge.s32.totalorder %v1184, 32
        %vm2196 = vcmp.ge.s32.totalorder %v1185, 32
        %vm2197 = vcmp.ge.s32.totalorder %v1186, 32
        %vm2198 = vcmp.ge.s32.totalorder %v1187, 32
        %vm2199 = vcmp.ge.s32.totalorder %v1188, 32
        %vm2200 = vcmp.ge.s32.totalorder %v1189, 32
        %vm2201 = vcmp.ge.s32.totalorder %v1190, 32
        %vm2202 = vcmp.ge.s32.totalorder %v1191, 32
        %vm2203 = vcmp.ge.s32.totalorder %v1192, 32
        %vm2204 = vcmp.ge.s32.totalorder %v1193, 32
        %v2205 = vsel %vm2189, 1, 0
        %v2206 = vsel %vm2190, 1, 0
        %v2207 = vsel %vm2191, 1, 0
        %v2208 = vsel %vm2192, 1, 0
        %v2209 = vsel %vm2193, 1, 0
        %v2210 = vsel %vm2194, 1, 0
        %v2211 = vsel %vm2195, 1, 0
        %v2212 = vsel %vm2196, 1, 0
        %v2213 = vsel %vm2197, 1, 0
        %v2214 = vsel %vm2198, 1, 0
        %v2215 = vsel %vm2199, 1, 0
        %v2216 = vsel %vm2200, 1, 0
        %v2217 = vsel %vm2201, 1, 0
        %v2218 = vsel %vm2202, 1, 0
        %v2219 = vsel %vm2203, 1, 0
        %v2220 = vsel %vm2204, 1, 0
        %v2221 = vcvt.s32.f32 %v2205
        %v2222 = vcvt.s32.f32 %v2206
        %v2223 = vcvt.s32.f32 %v2207
        %v2224 = vcvt.s32.f32 %v2208
        %v2225 = vcvt.s32.f32 %v2209
        %v2226 = vcvt.s32.f32 %v2210
        %v2227 = vcvt.s32.f32 %v2211
        %v2228 = vcvt.s32.f32 %v2212
        %v2229 = vcvt.s32.f32 %v2213
        %v2230 = vcvt.s32.f32 %v2214
        %v2231 = vcvt.s32.f32 %v2215
        %v2232 = vcvt.s32.f32 %v2216
        %v2233 = vcvt.s32.f32 %v2217
        %v2234 = vcvt.s32.f32 %v2218
        %v2235 = vcvt.s32.f32 %v2219
        %v2236 = vcvt.s32.f32 %v2220
        %v2237 = vmul.f32 %v2181, %v2221
        %v2238 = vmul.f32 %v2182, %v2221
        %v2239 = vmul.f32 %v2183, %v2222
        %v2240 = vmul.f32 %v2184, %v2222
        %v2241 = vmul.f32 %v2185, %v2223
        %v2242 = vmul.f32 %v2186, %v2223
        %v2243 = vmul.f32 %v2187, %v2224
        %v2244 = vmul.f32 %v2188, %v2224
        %v2245 = vmul.f32 %v2157, %v2225
        %v2246 = vmul.f32 %v2158, %v2225
        %v2247 = vmul.f32 %v2159, %v2226
        %v2248 = vmul.f32 %v2160, %v2226
        %v2249 = vmul.f32 %v2161, %v2227
        %v2250 = vmul.f32 %v2162, %v2227
        %v2251 = vmul.f32 %v2163, %v2228
        %v2252 = vmul.f32 %v2164, %v2228
        %v2253 = vmul.f32 %v2165, %v2229
        %v2254 = vmul.f32 %v2166, %v2229
        %v2255 = vmul.f32 %v2167, %v2230
        %v2256 = vmul.f32 %v2168, %v2230
        %v2257 = vmul.f32 %v2169, %v2231
        %v2258 = vmul.f32 %v2170, %v2231
        %v2259 = vmul.f32 %v2171, %v2232
        %v2260 = vmul.f32 %v2172, %v2232
        %v2261 = vmul.f32 %v2173, %v2233
        %v2262 = vmul.f32 %v2174, %v2233
        %v2263 = vmul.f32 %v2175, %v2234
        %v2264 = vmul.f32 %v2176, %v2234
        %v2265 = vmul.f32 %v2177, %v2235
        %v2266 = vmul.f32 %v2178, %v2235
        %v2267 = vmul.f32 %v2179, %v2236
        %v2268 = vmul.f32 %v2180, %v2236
        %v2269 = vsub.f32 1.0, %v2221
        %v2270 = vsub.f32 1.0, %v2222
        %v2271 = vsub.f32 1.0, %v2223
        %v2272 = vsub.f32 1.0, %v2224
        %v2273 = vsub.f32 1.0, %v2225
        %v2274 = vsub.f32 1.0, %v2226
        %v2275 = vsub.f32 1.0, %v2227
        %v2276 = vsub.f32 1.0, %v2228
        %v2277 = vsub.f32 1.0, %v2229
        %v2278 = vsub.f32 1.0, %v2230
        %v2279 = vsub.f32 1.0, %v2231
        %v2280 = vsub.f32 1.0, %v2232
        %v2281 = vsub.f32 1.0, %v2233
        %v2282 = vsub.f32 1.0, %v2234
        %v2283 = vsub.f32 1.0, %v2235
        %v2284 = vsub.f32 1.0, %v2236
        %v2285 = vadd.f32 %v2237, %v2269
        %v2286 = vadd.f32 %v2238, %v2269
        %v2287 = vadd.f32 %v2239, %v2270
        %v2288 = vadd.f32 %v2240, %v2270
        %v2289 = vadd.f32 %v2241, %v2271
        %v2290 = vadd.f32 %v2242, %v2271
        %v2291 = vadd.f32 %v2243, %v2272
        %v2292 = vadd.f32 %v2244, %v2272
        %v2293 = vadd.f32 %v2245, %v2273
        %v2294 = vadd.f32 %v2246, %v2273
        %v2295 = vadd.f32 %v2247, %v2274
        %v2296 = vadd.f32 %v2248, %v2274
        %v2297 = vadd.f32 %v2249, %v2275
        %v2298 = vadd.f32 %v2250, %v2275
        %v2299 = vadd.f32 %v2251, %v2276
        %v2300 = vadd.f32 %v2252, %v2276
        %v2301 = vadd.f32 %v2253, %v2277
        %v2302 = vadd.f32 %v2254, %v2277
        %v2303 = vadd.f32 %v2255, %v2278
        %v2304 = vadd.f32 %v2256, %v2278
        %v2305 = vadd.f32 %v2257, %v2279
        %v2306 = vadd.f32 %v2258, %v2279
        %v2307 = vadd.f32 %v2259, %v2280
        %v2308 = vadd.f32 %v2260, %v2280
        %v2309 = vadd.f32 %v2261, %v2281
        %v2310 = vadd.f32 %v2262, %v2281
        %v2311 = vadd.f32 %v2263, %v2282
        %v2312 = vadd.f32 %v2264, %v2282
        %v2313 = vadd.f32 %v2265, %v2283
        %v2314 = vadd.f32 %v2266, %v2283
        %v2315 = vadd.f32 %v2267, %v2284
        %v2316 = vadd.f32 %v2268, %v2284
        %v2317 = vmul.f32 %v2157, %v2285
        %v2318 = vmul.f32 %v2158, %v2286
        %v2319 = vmul.f32 %v2159, %v2287
        %v2320 = vmul.f32 %v2160, %v2288
        %v2321 = vmul.f32 %v2161, %v2289
        %v2322 = vmul.f32 %v2162, %v2290
        %v2323 = vmul.f32 %v2163, %v2291
        %v2324 = vmul.f32 %v2164, %v2292
        %v2325 = vmul.f32 %v2165, %v2293
        %v2326 = vmul.f32 %v2166, %v2294
        %v2327 = vmul.f32 %v2167, %v2295
        %v2328 = vmul.f32 %v2168, %v2296
        %v2329 = vmul.f32 %v2169, %v2297
        %v2330 = vmul.f32 %v2170, %v2298
        %v2331 = vmul.f32 %v2171, %v2299
        %v2332 = vmul.f32 %v2172, %v2300
        %v2333 = vmul.f32 %v2173, %v2301
        %v2334 = vmul.f32 %v2174, %v2302
        %v2335 = vmul.f32 %v2175, %v2303
        %v2336 = vmul.f32 %v2176, %v2304
        %v2337 = vmul.f32 %v2177, %v2305
        %v2338 = vmul.f32 %v2178, %v2306
        %v2339 = vmul.f32 %v2179, %v2307
        %v2340 = vmul.f32 %v2180, %v2308
        %v2341 = vmul.f32 %v2181, %v2309
        %v2342 = vmul.f32 %v2182, %v2310
        %v2343 = vmul.f32 %v2183, %v2311
        %v2344 = vmul.f32 %v2184, %v2312
        %v2345 = vmul.f32 %v2185, %v2313
        %v2346 = vmul.f32 %v2186, %v2314
        %v2347 = vmul.f32 %v2187, %v2315
        %v2348 = vmul.f32 %v2188, %v2316
        %vm2349 = vcmp.ge.s32.totalorder %v1178, 64
        %vm2350 = vcmp.ge.s32.totalorder %v1179, 64
        %vm2351 = vcmp.ge.s32.totalorder %v1180, 64
        %vm2352 = vcmp.ge.s32.totalorder %v1181, 64
        %vm2353 = vcmp.ge.s32.totalorder %v1182, 64
        %vm2354 = vcmp.ge.s32.totalorder %v1183, 64
        %vm2355 = vcmp.ge.s32.totalorder %v1184, 64
        %vm2356 = vcmp.ge.s32.totalorder %v1185, 64
        %vm2357 = vcmp.ge.s32.totalorder %v1186, 64
        %vm2358 = vcmp.ge.s32.totalorder %v1187, 64
        %vm2359 = vcmp.ge.s32.totalorder %v1188, 64
        %vm2360 = vcmp.ge.s32.totalorder %v1189, 64
        %vm2361 = vcmp.ge.s32.totalorder %v1190, 64
        %vm2362 = vcmp.ge.s32.totalorder %v1191, 64
        %vm2363 = vcmp.ge.s32.totalorder %v1192, 64
        %vm2364 = vcmp.ge.s32.totalorder %v1193, 64
        %v2365 = vsel %vm2349, 1, 0
        %v2366 = vsel %vm2350, 1, 0
        %v2367 = vsel %vm2351, 1, 0
        %v2368 = vsel %vm2352, 1, 0
        %v2369 = vsel %vm2353, 1, 0
        %v2370 = vsel %vm2354, 1, 0
        %v2371 = vsel %vm2355, 1, 0
        %v2372 = vsel %vm2356, 1, 0
        %v2373 = vsel %vm2357, 1, 0
        %v2374 = vsel %vm2358, 1, 0
        %v2375 = vsel %vm2359, 1, 0
        %v2376 = vsel %vm2360, 1, 0
        %v2377 = vsel %vm2361, 1, 0
        %v2378 = vsel %vm2362, 1, 0
        %v2379 = vsel %vm2363, 1, 0
        %v2380 = vsel %vm2364, 1, 0
        %v2381 = vcvt.s32.f32 %v2365
        %v2382 = vcvt.s32.f32 %v2366
        %v2383 = vcvt.s32.f32 %v2367
        %v2384 = vcvt.s32.f32 %v2368
        %v2385 = vcvt.s32.f32 %v2369
        %v2386 = vcvt.s32.f32 %v2370
        %v2387 = vcvt.s32.f32 %v2371
        %v2388 = vcvt.s32.f32 %v2372
        %v2389 = vcvt.s32.f32 %v2373
        %v2390 = vcvt.s32.f32 %v2374
        %v2391 = vcvt.s32.f32 %v2375
        %v2392 = vcvt.s32.f32 %v2376
        %v2393 = vcvt.s32.f32 %v2377
        %v2394 = vcvt.s32.f32 %v2378
        %v2395 = vcvt.s32.f32 %v2379
        %v2396 = vcvt.s32.f32 %v2380
        %v2397 = vmul.f32 %v2333, %v2381
        %v2398 = vmul.f32 %v2334, %v2381
        %v2399 = vmul.f32 %v2335, %v2382
        %v2400 = vmul.f32 %v2336, %v2382
        %v2401 = vmul.f32 %v2337, %v2383
        %v2402 = vmul.f32 %v2338, %v2383
        %v2403 = vmul.f32 %v2339, %v2384
        %v2404 = vmul.f32 %v2340, %v2384
        %v2405 = vmul.f32 %v2341, %v2385
        %v2406 = vmul.f32 %v2342, %v2385
        %v2407 = vmul.f32 %v2343, %v2386
        %v2408 = vmul.f32 %v2344, %v2386
        %v2409 = vmul.f32 %v2345, %v2387
        %v2410 = vmul.f32 %v2346, %v2387
        %v2411 = vmul.f32 %v2347, %v2388
        %v2412 = vmul.f32 %v2348, %v2388
        %v2413 = vmul.f32 %v2317, %v2389
        %v2414 = vmul.f32 %v2318, %v2389
        %v2415 = vmul.f32 %v2319, %v2390
        %v2416 = vmul.f32 %v2320, %v2390
        %v2417 = vmul.f32 %v2321, %v2391
        %v2418 = vmul.f32 %v2322, %v2391
        %v2419 = vmul.f32 %v2323, %v2392
        %v2420 = vmul.f32 %v2324, %v2392
        %v2421 = vmul.f32 %v2325, %v2393
        %v2422 = vmul.f32 %v2326, %v2393
        %v2423 = vmul.f32 %v2327, %v2394
        %v2424 = vmul.f32 %v2328, %v2394
        %v2425 = vmul.f32 %v2329, %v2395
        %v2426 = vmul.f32 %v2330, %v2395
        %v2427 = vmul.f32 %v2331, %v2396
        %v2428 = vmul.f32 %v2332, %v2396
        %v2429 = vsub.f32 1.0, %v2381
        %v2430 = vsub.f32 1.0, %v2382
        %v2431 = vsub.f32 1.0, %v2383
        %v2432 = vsub.f32 1.0, %v2384
        %v2433 = vsub.f32 1.0, %v2385
        %v2434 = vsub.f32 1.0, %v2386
        %v2435 = vsub.f32 1.0, %v2387
        %v2436 = vsub.f32 1.0, %v2388
        %v2437 = vsub.f32 1.0, %v2389
        %v2438 = vsub.f32 1.0, %v2390
        %v2439 = vsub.f32 1.0, %v2391
        %v2440 = vsub.f32 1.0, %v2392
        %v2441 = vsub.f32 1.0, %v2393
        %v2442 = vsub.f32 1.0, %v2394
        %v2443 = vsub.f32 1.0, %v2395
        %v2444 = vsub.f32 1.0, %v2396
        %v2445 = vadd.f32 %v2397, %v2429
        %v2446 = vadd.f32 %v2398, %v2429
        %v2447 = vadd.f32 %v2399, %v2430
        %v2448 = vadd.f32 %v2400, %v2430
        %v2449 = vadd.f32 %v2401, %v2431
        %v2450 = vadd.f32 %v2402, %v2431
        %v2451 = vadd.f32 %v2403, %v2432
        %v2452 = vadd.f32 %v2404, %v2432
        %v2453 = vadd.f32 %v2405, %v2433
        %v2454 = vadd.f32 %v2406, %v2433
        %v2455 = vadd.f32 %v2407, %v2434
        %v2456 = vadd.f32 %v2408, %v2434
        %v2457 = vadd.f32 %v2409, %v2435
        %v2458 = vadd.f32 %v2410, %v2435
        %v2459 = vadd.f32 %v2411, %v2436
        %v2460 = vadd.f32 %v2412, %v2436
        %v2461 = vadd.f32 %v2413, %v2437
        %v2462 = vadd.f32 %v2414, %v2437
        %v2463 = vadd.f32 %v2415, %v2438
        %v2464 = vadd.f32 %v2416, %v2438
        %v2465 = vadd.f32 %v2417, %v2439
        %v2466 = vadd.f32 %v2418, %v2439
        %v2467 = vadd.f32 %v2419, %v2440
        %v2468 = vadd.f32 %v2420, %v2440
        %v2469 = vadd.f32 %v2421, %v2441
        %v2470 = vadd.f32 %v2422, %v2441
        %v2471 = vadd.f32 %v2423, %v2442
        %v2472 = vadd.f32 %v2424, %v2442
        %v2473 = vadd.f32 %v2425, %v2443
        %v2474 = vadd.f32 %v2426, %v2443
        %v2475 = vadd.f32 %v2427, %v2444
        %v2476 = vadd.f32 %v2428, %v2444
        %v2477 = vmul.f32 %v2317, %v2445
        %v2478 = vmul.f32 %v2318, %v2446
        %v2479 = vmul.f32 %v2319, %v2447
        %v2480 = vmul.f32 %v2320, %v2448
        %v2481 = vmul.f32 %v2321, %v2449
        %v2482 = vmul.f32 %v2322, %v2450
        %v2483 = vmul.f32 %v2323, %v2451
        %v2484 = vmul.f32 %v2324, %v2452
        %v2485 = vmul.f32 %v2325, %v2453
        %v2486 = vmul.f32 %v2326, %v2454
        %v2487 = vmul.f32 %v2327, %v2455
        %v2488 = vmul.f32 %v2328, %v2456
        %v2489 = vmul.f32 %v2329, %v2457
        %v2490 = vmul.f32 %v2330, %v2458
        %v2491 = vmul.f32 %v2331, %v2459
        %v2492 = vmul.f32 %v2332, %v2460
        %v2493 = vmul.f32 %v2333, %v2461
        %v2494 = vmul.f32 %v2334, %v2462
        %v2495 = vmul.f32 %v2335, %v2463
        %v2496 = vmul.f32 %v2336, %v2464
        %v2497 = vmul.f32 %v2337, %v2465
        %v2498 = vmul.f32 %v2338, %v2466
        %v2499 = vmul.f32 %v2339, %v2467
        %v2500 = vmul.f32 %v2340, %v2468
        %v2501 = vmul.f32 %v2341, %v2469
        %v2502 = vmul.f32 %v2342, %v2470
        %v2503 = vmul.f32 %v2343, %v2471
        %v2504 = vmul.f32 %v2344, %v2472
        %v2505 = vmul.f32 %v2345, %v2473
        %v2506 = vmul.f32 %v2346, %v2474
        %v2507 = vmul.f32 %v2347, %v2475
        %v2508 = vmul.f32 %v2348, %v2476
        %v2509 = vrot.slane %v2477, 7
        %v2510 = vrot.slane %v2478, 7
        %v2511 = vrot.slane %v2479, 7
        %v2512 = vrot.slane %v2480, 7
        %v2513 = vrot.slane %v2481, 7
        %v2514 = vrot.slane %v2482, 7
        %v2515 = vrot.slane %v2483, 7
        %v2516 = vrot.slane %v2484, 7
        %v2517 = vrot.slane %v2485, 7
        %v2518 = vrot.slane %v2486, 7
        %v2519 = vrot.slane %v2487, 7
        %v2520 = vrot.slane %v2488, 7
        %v2521 = vrot.slane %v2489, 7
        %v2522 = vrot.slane %v2490, 7
        %v2523 = vrot.slane %v2491, 7
        %v2524 = vrot.slane %v2492, 7
        %v2525 = vrot.slane %v2493, 7
        %v2526 = vrot.slane %v2494, 7
        %v2527 = vrot.slane %v2495, 7
        %v2528 = vrot.slane %v2496, 7
        %v2529 = vrot.slane %v2497, 7
        %v2530 = vrot.slane %v2498, 7
        %v2531 = vrot.slane %v2499, 7
        %v2532 = vrot.slane %v2500, 7
        %v2533 = vrot.slane %v2501, 7
        %v2534 = vrot.slane %v2502, 7
        %v2535 = vrot.slane %v2503, 7
        %v2536 = vrot.slane %v2504, 7
        %v2537 = vrot.slane %v2505, 7
        %v2538 = vrot.slane %v2506, 7
        %v2539 = vrot.slane %v2507, 7
        %v2540 = vrot.slane %v2508, 7
        %v2541 = vsel %vm1274, %v2537, %v2539
        %v2542 = vsel %vm1274, %v2538, %v2540
        %v2543 = vsel %vm1274, %v2535, %v2537
        %v2544 = vsel %vm1274, %v2536, %v2538
        %v2545 = vsel %vm1274, %v2533, %v2535
        %v2546 = vsel %vm1274, %v2534, %v2536
        %v2547 = vsel %vm1274, %v2531, %v2533
        %v2548 = vsel %vm1274, %v2532, %v2534
        %v2549 = vsel %vm1274, %v2529, %v2531
        %v2550 = vsel %vm1274, %v2530, %v2532
        %v2551 = vsel %vm1274, %v2527, %v2529
        %v2552 = vsel %vm1274, %v2528, %v2530
        %v2553 = vsel %vm1274, %v2525, %v2527
        %v2554 = vsel %vm1274, %v2526, %v2528
        %v2555 = vsel %vm1274, %v2523, %v2525
        %v2556 = vsel %vm1274, %v2524, %v2526
        %v2557 = vsel %vm1274, %v2521, %v2523
        %v2558 = vsel %vm1274, %v2522, %v2524
        %v2559 = vsel %vm1274, %v2519, %v2521
        %v2560 = vsel %vm1274, %v2520, %v2522
        %v2561 = vsel %vm1274, %v2517, %v2519
        %v2562 = vsel %vm1274, %v2518, %v2520
        %v2563 = vsel %vm1274, %v2515, %v2517
        %v2564 = vsel %vm1274, %v2516, %v2518
        %v2565 = vsel %vm1274, %v2513, %v2515
        %v2566 = vsel %vm1274, %v2514, %v2516
        %v2567 = vsel %vm1274, %v2511, %v2513
        %v2568 = vsel %vm1274, %v2512, %v2514
        %v2569 = vsel %vm1274, %v2509, %v2511
        %v2570 = vsel %vm1274, %v2510, %v2512
        %v2571 = vsel %vm1274, %v2539, %v2509
        %v2572 = vsel %vm1274, %v2540, %v2510
        %v2573 = vmul.f32 %v2571, %v1226
        %v2574 = vmul.f32 %v2572, %v1226
        %v2575 = vmul.f32 %v2569, %v1227
        %v2576 = vmul.f32 %v2570, %v1227
        %v2577 = vmul.f32 %v2567, %v1228
        %v2578 = vmul.f32 %v2568, %v1228
        %v2579 = vmul.f32 %v2565, %v1229
        %v2580 = vmul.f32 %v2566, %v1229
        %v2581 = vmul.f32 %v2563, %v1230
        %v2582 = vmul.f32 %v2564, %v1230
        %v2583 = vmul.f32 %v2561, %v1231
        %v2584 = vmul.f32 %v2562, %v1231
        %v2585 = vmul.f32 %v2559, %v1232
        %v2586 = vmul.f32 %v2560, %v1232
        %v2587 = vmul.f32 %v2557, %v1233
        %v2588 = vmul.f32 %v2558, %v1233
        %v2589 = vmul.f32 %v2555, %v1234
        %v2590 = vmul.f32 %v2556, %v1234
        %v2591 = vmul.f32 %v2553, %v1235
        %v2592 = vmul.f32 %v2554, %v1235
        %v2593 = vmul.f32 %v2551, %v1236
        %v2594 = vmul.f32 %v2552, %v1236
        %v2595 = vmul.f32 %v2549, %v1237
        %v2596 = vmul.f32 %v2550, %v1237
        %v2597 = vmul.f32 %v2547, %v1238
        %v2598 = vmul.f32 %v2548, %v1238
        %v2599 = vmul.f32 %v2545, %v1239
        %v2600 = vmul.f32 %v2546, %v1239
        %v2601 = vmul.f32 %v2543, %v1240
        %v2602 = vmul.f32 %v2544, %v1240
        %v2603 = vmul.f32 %v2541, %v1241
        %v2604 = vmul.f32 %v2542, %v1241
        %v2605 = vadd.f32 %v2573, %v1339
        %v2606 = vadd.f32 %v2574, %v1339
        %v2607 = vadd.f32 %v2575, %v1340
        %v2608 = vadd.f32 %v2576, %v1340
        %v2609 = vadd.f32 %v2577, %v1341
        %v2610 = vadd.f32 %v2578, %v1341
        %v2611 = vadd.f32 %v2579, %v1342
        %v2612 = vadd.f32 %v2580, %v1342
        %v2613 = vadd.f32 %v2581, %v1343
        %v2614 = vadd.f32 %v2582, %v1343
        %v2615 = vadd.f32 %v2583, %v1344
        %v2616 = vadd.f32 %v2584, %v1344
        %v2617 = vadd.f32 %v2585, %v1345
        %v2618 = vadd.f32 %v2586, %v1345
        %v2619 = vadd.f32 %v2587, %v1346
        %v2620 = vadd.f32 %v2588, %v1346
        %v2621 = vadd.f32 %v2589, %v1347
        %v2622 = vadd.f32 %v2590, %v1347
        %v2623 = vadd.f32 %v2591, %v1348
        %v2624 = vadd.f32 %v2592, %v1348
        %v2625 = vadd.f32 %v2593, %v1349
        %v2626 = vadd.f32 %v2594, %v1349
        %v2627 = vadd.f32 %v2595, %v1350
        %v2628 = vadd.f32 %v2596, %v1350
        %v2629 = vadd.f32 %v2597, %v1351
        %v2630 = vadd.f32 %v2598, %v1351
        %v2631 = vadd.f32 %v2599, %v1352
        %v2632 = vadd.f32 %v2600, %v1352
        %v2633 = vadd.f32 %v2601, %v1353
        %v2634 = vadd.f32 %v2602, %v1353
        %v2635 = vadd.f32 %v2603, %v1354
        %v2636 = vadd.f32 %v2604, %v1354
        %v2637 = vld [vmem:[#allocation2] sm:$0x3]
        %v2638 = vmul.f32 %v1113, %v2605
        %v2639 = vmul.f32 %v1114, %v2606
        %v2640 = vmul.f32 %v1115, %v2607
        %v2641 = vmul.f32 %v1116, %v2608
        %v2642 = vmul.f32 %v1117, %v2609
        %v2643 = vmul.f32 %v1118, %v2610
        %v2644 = vmul.f32 %v1119, %v2611
        %v2645 = vmul.f32 %v1120, %v2612
        %v2646 = vmul.f32 %v1121, %v2613
        %v2647 = vmul.f32 %v1122, %v2614
        %v2648 = vmul.f32 %v1123, %v2615
        %v2649 = vmul.f32 %v1124, %v2616
        %v2650 = vmul.f32 %v1125, %v2617
        %v2651 = vmul.f32 %v1126, %v2618
        %v2652 = vmul.f32 %v1127, %v2619
        %v2653 = vmul.f32 %v1128, %v2620
        %v2654 = vmul.f32 %v1129, %v2621
        %v2655 = vmul.f32 %v1130, %v2622
        %v2656 = vmul.f32 %v1131, %v2623
        %v2657 = vmul.f32 %v1132, %v2624
        %v2658 = vmul.f32 %v1133, %v2625
        %v2659 = vmul.f32 %v1134, %v2626
        %v2660 = vmul.f32 %v1135, %v2627
        %v2661 = vmul.f32 %v1136, %v2628
        %v2662 = vmul.f32 %v1137, %v2629
        %v2663 = vmul.f32 %v1138, %v2630
        %v2664 = vmul.f32 %v1139, %v2631
        %v2665 = vmul.f32 %v1140, %v2632
        %v2666 = vmul.f32 %v1141, %v2633
        %v2667 = vmul.f32 %v1142, %v2634
        %v2668 = vmul.f32 %v1143, %v2635
        %v2669 = vmul.f32 %v1144, %v2636
        %v2671 = vlaneseq
        %v2672 = vshrl.u32 %v2671, 7
        %v2673 = vsub.s32 0, %v2672
        %v2674 = vrot.slane %v2637, %v2673
        %v2675 = vlaneseq
        %v2676 = vshrl.u32 %v2675, 7
        %v2677 = vsub.s32 1, %v2676
        %v2678 = vrot.slane %v2637, %v2677
        %v2681 = vmul.f32 %v2638, %v2674
        %v2682 = vmul.f32 %v2639, %v2678
        %v2683 = vmul.f32 %v2640, %v2674
        %v2684 = vmul.f32 %v2641, %v2678
        %v2685 = vmul.f32 %v2642, %v2674
        %v2686 = vmul.f32 %v2643, %v2678
        %v2687 = vmul.f32 %v2644, %v2674
        %v2688 = vmul.f32 %v2645, %v2678
        %v2689 = vmul.f32 %v2646, %v2674
        %v2690 = vmul.f32 %v2647, %v2678
        %v2691 = vmul.f32 %v2648, %v2674
        %v2692 = vmul.f32 %v2649, %v2678
        %v2693 = vmul.f32 %v2650, %v2674
        %v2694 = vmul.f32 %v2651, %v2678
        %v2695 = vmul.f32 %v2652, %v2674
        %v2696 = vmul.f32 %v2653, %v2678
        %v2697 = vmul.f32 %v2654, %v2674
        %v2698 = vmul.f32 %v2655, %v2678
        %v2699 = vmul.f32 %v2656, %v2674
        %v2700 = vmul.f32 %v2657, %v2678
        %v2701 = vmul.f32 %v2658, %v2674
        %v2702 = vmul.f32 %v2659, %v2678
        %v2703 = vmul.f32 %v2660, %v2674
        %v2704 = vmul.f32 %v2661, %v2678
        %v2705 = vmul.f32 %v2662, %v2674
        %v2706 = vmul.f32 %v2663, %v2678
        %v2707 = vmul.f32 %v2664, %v2674
        %v2708 = vmul.f32 %v2665, %v2678
        %v2709 = vmul.f32 %v2666, %v2674
        %v2710 = vmul.f32 %v2667, %v2678
        %v2711 = vmul.f32 %v2668, %v2674
        %v2712 = vmul.f32 %v2669, %v2678
        %v2713 = vpack.c.bf16 %v2683, %v2681
        %v2714 = vpack.c.bf16 %v2684, %v2682
        %v2715 = vpack.c.bf16 %v2687, %v2685
        %v2716 = vpack.c.bf16 %v2688, %v2686
        %v2717 = vpack.c.bf16 %v2691, %v2689
        %v2718 = vpack.c.bf16 %v2692, %v2690
        %v2719 = vpack.c.bf16 %v2695, %v2693
        %v2720 = vpack.c.bf16 %v2696, %v2694
        %v2721 = vpack.c.bf16 %v2699, %v2697
        %v2722 = vpack.c.bf16 %v2700, %v2698
        %v2723 = vpack.c.bf16 %v2703, %v2701
        %v2724 = vpack.c.bf16 %v2704, %v2702
        %v2725 = vpack.c.bf16 %v2707, %v2705
        %v2726 = vpack.c.bf16 %v2708, %v2706
        %v2727 = vpack.c.bf16 %v2711, %v2709
        %v2728 = vpack.c.bf16 %v2712, %v2710
        %v2729 = vld [vmem:[%s268] sm:$0x77]
        %v2730 = vld [vmem:[%s259] sm:$0x3]
        %2731 = vmatprep.subr.bf16.mxu0 %v2714
        %2732 = vmatpush1.bf16.msra.mxu0 %v2713
        %2733 = vmatprep.subr.bf16.mxu0 %v2716
        %2734 = vmatpush1.bf16.msra.mxu0 %v2715
        %2735 = vmatprep.subr.bf16.mxu0 %v2718
        %2736 = vmatpush1.bf16.msra.mxu0 %v2717
        %2737 = vmatprep.subr.bf16.mxu0 %v2720
        %2738 = vmatpush1.bf16.msra.mxu0 %v2719
        %2739 = vmatprep.subr.bf16.mxu0 %v2722
        %2740 = vmatpush1.bf16.msra.mxu0 %v2721
        %2741 = vmatprep.subr.bf16.mxu0 %v2724
        %2742 = vmatpush1.bf16.msra.mxu0 %v2723
        %2743 = vmatprep.subr.bf16.mxu0 %v2726
        %2744 = vmatpush1.bf16.msra.mxu0 %v2725
        %2745 = vmatprep.subr.bf16.mxu0 %v2728
        %2746 = vmatpush1.bf16.msra.mxu0 %v2727
        %2747 = vmatprep.subr.bf16.mxu0 0
        %2748 = vmatpush1.bf16.msra.mxu0 0
        %2749 = vmatprep.subr.bf16.mxu0 0
        %2750 = vmatpush1.bf16.msra.mxu0 0
        %2751 = vmatprep.subr.bf16.mxu0 0
        %2752 = vmatpush1.bf16.msra.mxu0 0
        %2753 = vmatprep.subr.bf16.mxu0 0
        %2754 = vmatpush1.bf16.msra.mxu0 0
        %2755 = vmatprep.subr.bf16.mxu0 0
        %2756 = vmatpush1.bf16.msra.mxu0 0
        %2757 = vmatprep.subr.bf16.mxu0 0
        %2758 = vmatpush1.bf16.msra.mxu0 0
        %2759 = vmatprep.subr.bf16.mxu0 0
        %2760 = vmatpush1.bf16.msra.mxu0 0
        %2761 = vmatprep.subr.bf16.mxu0 0
        %2762 = vmatpush1.bf16.msra.mxu0 0
        %2763 = vmatprep.mubr.bf16.mxu0 0
        %2764 = vmatmul.mubr.bf16.gmra.mrb[0].mxu0 %v2730
        %v2765 = vpop.f32.mrb[0].mxu0
        %v2766 = vadd.f32 0.0, %v2765
        %v2767 = vpop.f32.mrb[0].mxu0
        %v2768 = vadd.f32 0.0, %v2767
        %v2769 = vpop.f32.mrb[0].mxu0
        %v2770 = vpop.f32.mrb[0].mxu0
        %2771 = vdwg.mxu0
        %v2774 = vcombine.low %v2766, %v2768
        %v2776 = vadd.f32 %v2729, %v2774
        %2777 = vst [vmem:[%s268] sm:$0x77] %v2776
        %v2780 = vcombine.high %v2507, %v2508
        %v2782 = vunpack.c.l.s4 1966171168
        %v2783 = vunpack.c.0.s8 %v2782
        %v2784 = vlaneseq
        %v2785 = vshrl.u32 %v2784, 7
        %v2786 = vsub.s32 %v2783, %v2785
        %v2787 = vrot.slane %v2780, %v2786
        %v2788 = vcombine.high %v2787, %v2787
        %v2790 = vunpack.c.l.s4 1966171168
        %v2791 = vunpack.c.0.s8 %v2790
        %v2792 = vlaneseq
        %v2793 = vshrl.u32 %v2792, 7
        %v2794 = vsub.s32 %v2791, %v2793
        %v2795 = vrot.slane %v2788, %v2794
        %v2796 = vcombine.high %v2795, %v2795
        %v2798 = vmul.f32 %v2637, %v2796
        %v2799 = vlaneseq
        %vm2800 = vcmp.ge.s32.totalorder %v2799, 0
        %vm2801 = vcmp.lt.s32.totalorder %v2799, 256
        %vm2802 = vmand %vm2800, %vm2801
        %2803 = vst.msk [vmem:[#allocation2] sm:$0x3] %vm2802, %v2798
        %s2804 = scalar_lea.vmem %s240, 2
        %v2805 = vld [vmem:[%s2804] ss:$4 sm:$0x3]
        %v2806 = vmul.f32 %v2798, %v2805
        %v2808 = vlaneseq
        %v2809 = vshrl.u32 %v2808, 7
        %v2810 = vsub.s32 0, %v2809
        %v2811 = vrot.slane %v2806, %v2810
        %v2812 = vlaneseq
        %v2813 = vshrl.u32 %v2812, 7
        %v2814 = vsub.s32 1, %v2813
        %v2815 = vrot.slane %v2806, %v2814
        %vm2818 = vcmask 1040384
        %v2819 = vsel %vm2818, %v2811, -inf
        %v2820 = vsel %vm2818, %v2815, -inf
        %v2821 = vmax.f32 %v2819, %v2820
        %2822 = vmax.xlane.f32.xlu0 %v2821
        %v2823 = vpop.xlane.xlu0 %2822
        %s2824 = vtos %v2823
        %p2825 = scmp.gt.f32.partialorder %s2824, 0.0001
        %s2826 = scalar_select %p2825, 1, 0
        %s2827 = scalar_lea.smem [#allocation3], 0
        %2828 = sst [smem:[%s2827]] %s2826
      $region40: #{_forward_jit.1} parent=31 // pred_fallthru
        _
      %s2829 = smul.u32 2, %s20
      %p2830 = scmp.lt.s32.totalorder %s19, 1
      %s2831 = scalar_select %p2830, %s19, 1
      %p2832 = scmp.lt.s32.totalorder %s2829, 1
      %s2833 = scalar_select %p2832, %s2829, 1
      %s2834 = smul.addr %s2831, 2
      %s2835 = sadd.s32 %s2833, %s2834
      %s2836 = smul.addr %s2835, 4
      %s2837 = scalar_lea.vmem %s3, %s2836
      // Predicated region
      $region41: #{_forward_jit.1} parent=31 // pred_check
        %p2838 = pneg %p135
      $region42: #{_forward_jit.1} parent=31 // pred_check_branch
        %2840 = sbr.rel (%p2838) target = $region44
      $region43: #{_forward_jit.1} parent=31 // pred_region
        %s2841 = smul.u32 2, %s20
      $region44: #{_forward_jit.1} parent=31 // pred_fallthru
        _
    $region32: #{_forward_jit.1} parent=5 // pred_fallthru
      _
    %p2842 = scmp.le.s32.totalorder 2, %s9
    // Predicated region
    $region45: #{_forward_jit.1} parent=5 // pred_check
      %p2843 = pneg %p2842
    $region46: #{_forward_jit.1} parent=5 // pred_check_branch
      %2845 = sbr.rel (%p2843) target = $region48
    $region47: #{_forward_jit.1} parent=5 // pred_region
      %s2846 = ssub.s32 %s9, 2
      // Predicated region
      $region49: #{_forward_jit.1} parent=47 // pred_check
        %p2847 = pneg %p141
      $region50: #{_forward_jit.1} parent=47 // pred_check_branch
        %2849 = sbr.rel (%p2847) target = $region52
      $region51: #{_forward_jit.1} parent=47 // pred_region
        %s2850 = smul.u32 2, %s23
        %p2851 = scmp.lt.s32.totalorder %s22, 1
        %s2852 = scalar_select %p2851, %s22, 1
        %p2853 = scmp.lt.s32.totalorder %s2850, 1
        %s2854 = scalar_select %p2853, %s2850, 1
        %s2855 = smul.addr %s2852, 2
        %s2856 = sadd.s32 %s2854, %s2855
        %s2857 = smul.addr %s2856, 4
        %s2858 = scalar_lea.vmem %s3, %s2857
      $region52: #{_forward_jit.1} parent=47 // pred_fallthru
        _
    $region48: #{_forward_jit.1} parent=5 // pred_fallthru
      _
  $region6: #{_forward_jit.1} parent=0 // loop_footer
    %s13 = sadd.s32 1, %s9
  $region7: #{_forward_jit.1} parent=0 // loop_footer_branch
    %8 = sbr.rel target = $region3
  $region8: #{_forward_jit.1} parent=0 // loop_exit
    _

</llo_original>
